<compile_context>
chip_gen: v7x
topology: tpu7x:2x2x1
jax: 0.10.0
libtpu: 0.0.40
codegen_flags: <defaults>
</compile_context>

<pallas_src>
import functools

import jax
import jax.numpy as jnp
from jax.experimental import pallas as pl
from jax.experimental.pallas import tpu as pltpu

_VMEM_LIMIT = 32 * 1024 * 1024   # peak tile working set here is ~2-3 MiB; 32 MiB is safe everywhere

_GROWTH = 32
_BN_SIZE = 4
_BLOCK_CONFIG = (6, 12, 24, 16)


def _rup(x, m):
    return (x + m - 1) // m * m


def _pick_tile(dim_p, quantum, cap):
    """Largest multiple of `quantum` that divides dim_p and is <= cap."""
    best = quantum
    t = quantum
    limit = min(cap, dim_p)
    while t <= limit:
        if dim_p % t == 0:
            best = t
        t += quantum
    return best


def _pad2(x, rows, cols):
    r, c = x.shape
    if r == rows and c == cols:
        return x
    return jnp.pad(x, ((0, rows - r), (0, cols - c)))


# ----------------------------------------------------------------------------
# Pallas kernels
# ----------------------------------------------------------------------------
def _make_mm_kernel(pre, post):
    """Tiled matmul with optional fused BN+ReLU prologue (per-K scale/bias on A tile)
    and/or fused BN+ReLU epilogue (per-N scale/bias on the accumulator)."""

    def kernel(*refs):
        idx = 0
        a_ref = refs[idx]; idx += 1
        if pre:
            sp_ref = refs[idx]; bp_ref = refs[idx + 1]; idx += 2
        w_ref = refs[idx]; idx += 1
        if post:
            sq_ref = refs[idx]; bq_ref = refs[idx + 1]; idx += 2
        o_ref = refs[idx]
        acc_ref = refs[idx + 1]

        @pl.when(pl.program_id(2) == 0)
        def _init():
            acc_ref[...] = jnp.zeros_like(acc_ref)

        a = a_ref[...]
        if pre:
            a = jnp.maximum(a * sp_ref[...] + bp_ref[...], 0.0)
        acc_ref[...] += jnp.dot(a.astype(jnp.bfloat16), w_ref[...],
                                preferred_element_type=jnp.float32)

        @pl.when(pl.program_id(2) == pl.num_programs(2) - 1)
        def _done():
            r = acc_ref[...]
            if post:
                r = jnp.maximum(r * sq_ref[...] + bq_ref[...], 0.0)
            o_ref[...] = r

    return kernel


def _make_reduce_kernel(n_terms, op, scale):
    def kernel(x_ref, o_ref):
        acc = x_ref[0]
        for r in range(1, n_terms):
            if op == "max":
                acc = jnp.maximum(acc, x_ref[r])
            else:
                acc = acc + x_ref[r]
        if op == "mean":
            acc = acc * scale
        o_ref[...] = acc

    return kernel


# ----------------------------------------------------------------------------
# Cached pallas_call builders (one Mosaic compile per distinct shape/fusion)
# ----------------------------------------------------------------------------
@functools.lru_cache(maxsize=None)
def _mm_call(Mp, Kp, Np, tm, tk, tn, pre, post):
    grid = (Mp // tm, Np // tn, Kp // tk)
    in_specs = [pl.BlockSpec((tm, tk), lambda i, j, k: (i, k))]
    if pre:
        in_specs += [pl.BlockSpec((1, tk), lambda i, j, k: (0, k)),
                     pl.BlockSpec((1, tk), lambda i, j, k: (0, k))]
    in_specs.append(pl.BlockSpec((tk, tn), lambda i, j, k: (k, j)))
    if post:
        in_specs += [pl.BlockSpec((1, tn), lambda i, j, k: (0, j)),
                     pl.BlockSpec((1, tn), lambda i, j, k: (0, j))]
    f = pl.pallas_call(
        _make_mm_kernel(pre, post),
        out_shape=jax.ShapeDtypeStruct((Mp, Np), jnp.float32),
        grid_spec=pltpu.PrefetchScalarGridSpec(
            num_scalar_prefetch=0,
            grid=grid,
            in_specs=in_specs,
            out_specs=pl.BlockSpec((tm, tn), lambda i, j, k: (i, j)),
            scratch_shapes=[pltpu.VMEM((tm, tn), jnp.float32)],
        ),
        compiler_params=pltpu.CompilerParams(
            dimension_semantics=("parallel", "parallel", "arbitrary"),
            vmem_limit_bytes=_VMEM_LIMIT,
        ),
    )
    return jax.jit(f)


@functools.lru_cache(maxsize=None)
def _reduce_call(n_terms, Rp, Cp, tr, op, scale):
    kernel = _make_reduce_kernel(n_terms, op, scale)
    f = pl.pallas_call(
        kernel,
        out_shape=jax.ShapeDtypeStruct((Rp, Cp), jnp.float32),
        grid_spec=pltpu.PrefetchScalarGridSpec(
            num_scalar_prefetch=0,
            grid=(Rp // tr,),
            in_specs=[pl.BlockSpec((n_terms, tr, Cp), lambda i: (0, i, 0))],
            out_specs=pl.BlockSpec((tr, Cp), lambda i: (i, 0)),
        ),
        compiler_params=pltpu.CompilerParams(
            dimension_semantics=("parallel",),
            vmem_limit_bytes=_VMEM_LIMIT,
        ),
    )
    return jax.jit(f)


@functools.lru_cache(maxsize=None)
def _pool_fc_call(HW, Nb, C, NCp):
    inv_hw = 1.0 / HW

    def kernel(x_ref, s_ref, b_ref, w_ref, fb_ref, o_ref):
        z = jnp.maximum(x_ref[...] * s_ref[...] + b_ref[...], 0.0)   # norm5 + relu
        pooled = jnp.sum(z, axis=0) * inv_hw                         # global avg pool
        o_ref[...] = jnp.dot(pooled.astype(jnp.bfloat16), w_ref[...],
                             preferred_element_type=jnp.float32) + fb_ref[...]

    vmem = pl.BlockSpec(memory_space=pltpu.MemorySpace.VMEM)
    f = pl.pallas_call(
        kernel,
        out_shape=jax.ShapeDtypeStruct((Nb, NCp), jnp.float32),
        in_specs=[vmem] * 5,
        out_specs=vmem,
        compiler_params=pltpu.CompilerParams(vmem_limit_bytes=_VMEM_LIMIT),
    )
    return jax.jit(f)


# ----------------------------------------------------------------------------
# Op wrappers (padding / im2col glue in plain JAX, hot path in Pallas)
# ----------------------------------------------------------------------------
def fused_matmul(a, w_pad, n_out, pre_pad=None, post_pad=None):
    """relu(a*pre_s+pre_b) [optional] -> @ w (bf16 MXU, f32 acc) -> relu(.*post_s+post_b) [optional].

    `w_pad`, `pre_pad`, `post_pad` are already padded/aligned at init time; only the
    activation matrix `a` is padded here (and only when needed)."""
    M, K = a.shape
    Kp, Np = w_pad.shape
    assert K <= Kp
    Mp = _rup(max(M, 8), 8)
    tm = _pick_tile(Mp, 8, 512)
    tk = _pick_tile(Kp, 128, 2048)
    tn = _pick_tile(Np, 128, 512)
    args = [_pad2(a, Mp, Kp)]
    if pre_pad is not None:
        args += [pre_pad[0], pre_pad[1]]
    args.append(w_pad)
    if post_pad is not None:
        args += [post_pad[0], post_pad[1]]
    out = _mm_call(Mp, Kp, Np, tm, tk, tn,
                   pre_pad is not None, post_pad is not None)(*args)
    return out[:M, :n_out]


def conv2d_fused(x, w_pad, KH, KW, cout, stride=1, pad=0, pre=None, post=None):
    # x: (N, H, W, Cin) NHWC; w_pad: (rup(KH*KW*Cin,128), rup(Cout,128)) bf16 (bias-free conv).
    # pre = BN+ReLU applied to the conv input (1x1 convs only, keeps zero-pad semantics);
    # post = BN+ReLU applied to the conv output.
    N, H, W, C = x.shape
    if KH == 1 and KW == 1 and stride == 1 and pad == 0:
        a = x.reshape(N * H * W, C)
        OH, OW = H, W
    else:
        assert pre is None  # BN-before-conv fusion only valid without spatial padding
        xp = jnp.pad(x, ((0, 0), (pad, pad), (pad, pad), (0, 0)))
        OH = (H + 2 * pad - KH) // stride + 1
        OW = (W + 2 * pad - KW) // stride + 1
        views = [xp[:, i:i + stride * OH:stride, j:j + stride * OW:stride, :]
                 for i in range(KH) for j in range(KW)]
        a = jnp.stack(views, axis=3).reshape(N * OH * OW, KH * KW * C)
    y = fused_matmul(a, w_pad, cout, pre_pad=pre, post_pad=post)
    return y.reshape(N, OH, OW, cout)


def reduce_terms(x, op):
    # x: (T, rows, C) -> (rows, C), reduce over T (max or mean) in a row-tiled Pallas kernel.
    T, R, C = x.shape
    Rp, Cp = _rup(R, 8), _rup(C, 128)
    tr = _pick_tile(Rp, 8, 512)
    if (Rp, Cp) != (R, C):
        x = jnp.pad(x, ((0, 0), (0, Rp - R), (0, Cp - C)))
    return _reduce_call(T, Rp, Cp, tr, op, 1.0 / T)(x)[:R, :C]


def maxpool3_s2_p1(x):
    N, H, W, C = x.shape
    k, stride, pad = 3, 2, 1
    xp = jnp.pad(x, ((0, 0), (pad, pad), (pad, pad), (0, 0)),
                 constant_values=float("-inf"))
    OH = (H + 2 * pad - k) // stride + 1
    OW = (W + 2 * pad - k) // stride + 1
    views = [xp[:, i:i + stride * OH:stride, j:j + stride * OW:stride, :]
             for i in range(k) for j in range(k)]
    stacked = jnp.stack(views, 0).reshape(k * k, N * OH * OW, C)
    return reduce_terms(stacked, "max").reshape(N, OH, OW, C)


def avgpool2_s2(x):
    N, H, W, C = x.shape
    OH, OW = H // 2, W // 2
    views = [x[:, i::2, j::2, :] for i in range(2) for j in range(2)]
    stacked = jnp.stack(views, 0).reshape(4, N * OH * OW, C)
    return reduce_terms(stacked, "mean").reshape(N, OH, OW, C)


def pool_fc(x, norm5, fc_w_pad, fc_b_pad, num_classes):
    # norm5 + F.relu + adaptive_avg_pool2d((1,1)) + flatten + Linear in one fused kernel.
    N, H, W, C = x.shape
    HW = H * W
    NCp = fc_w_pad.shape[1]
    Nb = _rup(max(N, 8), 8)
    x3 = jnp.transpose(x.reshape(N, HW, C), (1, 0, 2))          # (HW, N, C)
    if Nb != N:
        x3 = jnp.pad(x3, ((0, 0), (0, Nb - N), (0, 0)))
    s, b = norm5
    out = _pool_fc_call(HW, Nb, C, NCp)(x3, s, b, fc_w_pad, fc_b_pad)
    return out[:N, :num_classes]


# ----------------------------------------------------------------------------
# Deterministic synthetic DenseNet-121 parameters (weights stored matmul-ready,
# bf16, pre-padded to (8,128)-aligned shapes so the forward pass never pads params)
# ----------------------------------------------------------------------------
class _KeyGen:
    def __init__(self, seed):
        self._k = jax.random.PRNGKey(seed)

    def next(self):
        self._k, sub = jax.random.split(self._k)
        return sub


def _make_conv_mat(cout, cin, kh, kw, kg):
    fan_in = cin * kh * kw
    std = (2.0 / fan_in) ** 0.5
    w = std * jax.random.normal(kg.next(), (cout, cin, kh, kw), jnp.float32)
    # (Cout,Cin,KH,KW) -> (KH*KW*Cin, Cout): matches im2col column order (pos-major, cin-minor)
    w = jnp.transpose(w, (2, 3, 1, 0)).reshape(kh * kw * cin, cout)
    Kp, Np = _rup(kh * kw * cin, 128), _rup(cout, 128)
    return _pad2(w, Kp, Np).astype(jnp.bfloat16)


def _make_bn(C, kg, shape3=False, eps=1e-5):
    gamma = 1.0 + 0.1 * jax.random.normal(kg.next(), (C,), jnp.float32)
    beta = 0.05 * jax.random.normal(kg.next(), (C,), jnp.float32)
    running_mean = 0.01 * jax.random.normal(kg.next(), (C,), jnp.float32)
    running_var = jnp.ones((C,), jnp.float32)
    scale = gamma / jnp.sqrt(running_var + eps)
    bias = beta - running_mean * scale
    if shape3:                                   # used directly inside the pool_fc kernel
        return scale.reshape(1, 1, C), bias.reshape(1, 1, C)
    Cp = _rup(C, 128)
    scale = jnp.pad(scale, (0, Cp - C)).reshape(1, Cp)
    bias = jnp.pad(bias, (0, Cp - C)).reshape(1, Cp)
    return scale, bias


def init_params(num_classes=50, seed=0):
    kg = _KeyGen(seed)
    growth, bn_size = _GROWTH, _BN_SIZE
    params = {
        "conv0_w": _make_conv_mat(64, 3, 7, 7, kg),
        "norm0": _make_bn(64, kg),
        "blocks": [],
        "transitions": [],
    }
    ch = 64
    for bi, n_layers in enumerate(_BLOCK_CONFIG):
        layers = []
        for li in range(n_layers):
            cin = ch + li * growth
            layers.append({
                "norm1": _make_bn(cin, kg),
                "conv1_w": _make_conv_mat(bn_size * growth, cin, 1, 1, kg),
                "norm2": _make_bn(bn_size * growth, kg),
                "conv2_w": _make_conv_mat(growth, bn_size * growth, 3, 3, kg),
            })
        params["blocks"].append(layers)
        ch = ch + n_layers * growth
        if bi != len(_BLOCK_CONFIG) - 1:
            params["transitions"].append({
                "norm": _make_bn(ch, kg),
                "conv_w": _make_conv_mat(ch // 2, ch, 1, 1, kg),
            })
            ch = ch // 2
    params["norm5"] = _make_bn(ch, kg, shape3=True)               # ch == 1024
    fc_w = 0.02 * jax.random.normal(kg.next(), (num_classes, ch), jnp.float32)
    ncp = _rup(num_classes, 128)
    params["fc_w_mat"] = _pad2(jnp.transpose(fc_w), ch, ncp).astype(jnp.bfloat16)
    params["fc_b"] = jnp.zeros((1, ncp), jnp.float32)
    return params


# ----------------------------------------------------------------------------
# Forward pass (DenseNet-121 features -> relu -> global avg pool -> classifier)
# ----------------------------------------------------------------------------
def modified_densenet_forward(params, x_nchw, num_classes=50):
    x = jnp.transpose(x_nchw, (0, 2, 3, 1)).astype(jnp.float32)            # NCHW -> NHWC
    x = conv2d_fused(x, params["conv0_w"], 7, 7, 64, stride=2, pad=3,
                     post=params["norm0"])                                  # conv0+norm0+relu0
    x = maxpool3_s2_p1(x)                                                   # pool0
    ch = 64
    for bi, n_layers in enumerate(_BLOCK_CONFIG):
        for li in range(n_layers):
            p = params["blocks"][bi][li]
            # bn1+relu fused as conv1 prologue; bn2+relu fused as conv1 epilogue, so the 3x3
            # conv2 consumes the already-activated tensor (its zero padding is then correct).
            y = conv2d_fused(x, p["conv1_w"], 1, 1, _BN_SIZE * _GROWTH,
                             pre=p["norm1"], post=p["norm2"])
            new = conv2d_fused(y, p["conv2_w"], 3, 3, _GROWTH, stride=1, pad=1)
            x = jnp.concatenate([x, new], axis=-1)
        ch = ch + n_layers * _GROWTH
        if bi != len(_BLOCK_CONFIG) - 1:
            t = params["transitions"][bi]
            x = conv2d_fused(x, t["conv_w"], 1, 1, ch // 2, pre=t["norm"])  # bn+relu prologue
            x = avgpool2_s2(x)
            ch = ch // 2
    return pool_fc(x, params["norm5"], params["fc_w_mat"], params["fc_b"],
                   num_classes)                                             # norm5+relu+pool+fc


if __name__ == "__main__":
    num_classes = 50
    params = init_params(num_classes=num_classes, seed=0)

    key = jax.random.PRNGKey(0)
    # DenseNet-121 needs >= 32x32 input to survive its 5 spatial downsamplings.
    x = jax.random.normal(key, (2, 3, 32, 32), jnp.float32)

    fwd = jax.jit(modified_densenet_forward)
    logits = jax.block_until_ready(fwd(params, x))

    assert logits.shape == (2, num_classes), logits.shape
    assert bool(jnp.all(jnp.isfinite(logits)))
    print("KERNEL_OK")
</pallas_src>

<mosaic_0001>
module attributes {stable_mosaic.version = 11 : i64} {
  func.func @kernel(%arg0: i32, %arg1: i32, %arg2: i32, %arg3: memref<512x256xf32, #tpu.memory_space<vmem>>, %arg4: memref<256x128xbf16, #tpu.memory_space<vmem>>, %arg5: memref<1x128xf32, #tpu.memory_space<vmem>>, %arg6: memref<1x128xf32, #tpu.memory_space<vmem>>, %arg7: memref<512x128xf32, #tpu.memory_space<vmem>>, %arg8: memref<512x128xf32, #tpu.memory_space<vmem>>) attributes {dimension_semantics = [#tpu.dimension_semantics<parallel>, #tpu.dimension_semantics<parallel>, #tpu.dimension_semantics<arbitrary>], iteration_bounds = array<i64: 1, 1, 1>, scalar_prefetch = 0 : i64, scratch_operands = 1 : i64, tpu.core_type = #tpu.core_type<tc>, window_params = [{transform_indices = @transform_0, window_bounds = array<i64: 512, 256>}, {transform_indices = @transform_1, window_bounds = array<i64: 256, 128>}, {transform_indices = @transform_2, window_bounds = array<i64: 1, 128>}, {transform_indices = @transform_3, window_bounds = array<i64: 1, 128>}, {transform_indices = @transform_4, window_bounds = array<i64: 512, 128>}]} {
    %c0_i32 = arith.constant 0 : i32
    %0 = arith.cmpi eq, %arg2, %c0_i32 : i32
    %1 = arith.extui %0 : i1 to i32
    %c0_i32_0 = arith.constant 0 : i32
    %2 = arith.cmpi ne, %1, %c0_i32_0 : i32
    scf.if %2 {
      %cst_10 = arith.constant 0.000000e+00 : f32
      %13 = vector.broadcast %cst_10 : f32 to vector<512x128xf32>
      %c0_11 = arith.constant 0 : index
      %c0_12 = arith.constant 0 : index
      %14 = vector.load %arg8[%c0_11, %c0_12] : memref<512x128xf32, #tpu.memory_space<vmem>>, vector<512x128xf32>
      tpu.vector_store %arg8[%c0_11, %c0_12], %13 {strides = array<i32>} : memref<512x128xf32, #tpu.memory_space<vmem>>, vector<512x128xf32>,
    } else {
    }
    %c0 = arith.constant 0 : index
    %c0_1 = arith.constant 0 : index
    %3 = vector.load %arg3[%c0, %c0_1] : memref<512x256xf32, #tpu.memory_space<vmem>>, vector<512x256xf32>
    %c0_2 = arith.constant 0 : index
    %c0_3 = arith.constant 0 : index
    %4 = vector.load %arg8[%c0_2, %c0_3] : memref<512x128xf32, #tpu.memory_space<vmem>>, vector<512x128xf32>
    %5 = arith.truncf %3 : vector<512x256xf32> to vector<512x256xbf16>
    %c0_4 = arith.constant 0 : index
    %c0_5 = arith.constant 0 : index
    %6 = vector.load %arg4[%c0_4, %c0_5] : memref<256x128xbf16, #tpu.memory_space<vmem>>, vector<256x128xbf16>
    %cst = arith.constant dense<0.000000e+00> : vector<512x128xf32>
    %7 = tpu.matmul %5, %6, %cst {dimension_numbers = #tpu.dot_dimension_numbers<[1], [0], [0], [1], [0, 0, 1, 1], [], []>} : vector<512x256xbf16>, vector<256x128xbf16>, vector<512x128xf32> -> vector<512x128xf32>
    %8 = arith.addf %4, %7 : vector<512x128xf32>
    %c0_6 = arith.constant 0 : index
    %c0_7 = arith.constant 0 : index
    %9 = vector.load %arg8[%c0_6, %c0_7] : memref<512x128xf32, #tpu.memory_space<vmem>>, vector<512x128xf32>
    tpu.vector_store %arg8[%c0_6, %c0_7], %8 {strides = array<i32>} : memref<512x128xf32, #tpu.memory_space<vmem>>, vector<512x128xf32>,
    %c0_i32_8 = arith.constant 0 : i32
    %10 = arith.cmpi eq, %arg2, %c0_i32_8 : i32
    %11 = arith.extui %10 : i1 to i32
    %c0_i32_9 = arith.constant 0 : i32
    %12 = arith.cmpi ne, %11, %c0_i32_9 : i32
    scf.if %12 {
      %c0_10 = arith.constant 0 : index
      %c0_11 = arith.constant 0 : index
      %13 = vector.load %arg8[%c0_10, %c0_11] : memref<512x128xf32, #tpu.memory_space<vmem>>, vector<512x128xf32>
      %c0_12 = arith.constant 0 : index
      %c0_13 = arith.constant 0 : index
      %14 = vector.load %arg5[%c0_12, %c0_13] : memref<1x128xf32, #tpu.memory_space<vmem>>, vector<1x128xf32>
      %15 = vector.broadcast %14 : vector<1x128xf32> to vector<512x128xf32>
      %16 = arith.mulf %13, %15 : vector<512x128xf32>
      %c0_14 = arith.constant 0 : index
      %c0_15 = arith.constant 0 : index
      %17 = vector.load %arg6[%c0_14, %c0_15] : memref<1x128xf32, #tpu.memory_space<vmem>>, vector<1x128xf32>
      %18 = vector.broadcast %17 : vector<1x128xf32> to vector<512x128xf32>
      %19 = arith.addf %16, %18 : vector<512x128xf32>
      %cst_16 = arith.constant 0.000000e+00 : f32
      %20 = vector.broadcast %cst_16 : f32 to vector<512x128xf32>
      %21 = arith.maximumf %19, %20 : vector<512x128xf32>
      %c0_17 = arith.constant 0 : index
      %c0_18 = arith.constant 0 : index
      %22 = vector.load %arg7[%c0_17, %c0_18] : memref<512x128xf32, #tpu.memory_space<vmem>>, vector<512x128xf32>
      tpu.vector_store %arg7[%c0_17, %c0_18], %21 {strides = array<i32>} : memref<512x128xf32, #tpu.memory_space<vmem>>, vector<512x128xf32>,
    } else {
    }
    return
  }
  func.func @transform_0(%arg0: i32, %arg1: i32, %arg2: i32) -> (i32, i32) {
    %c0_i32 = arith.constant 0 : i32
    return %arg0, %arg2 : i32, i32
  }
  func.func @transform_1(%arg0: i32, %arg1: i32, %arg2: i32) -> (i32, i32) {
    %c0_i32 = arith.constant 0 : i32
    return %arg2, %arg1 : i32, i32
  }
  func.func @transform_2(%arg0: i32, %arg1: i32, %arg2: i32) -> (i32, i32) {
    %c0_i32 = arith.constant 0 : i32
    %c0_i32_0 = arith.constant 0 : i32
    return %c0_i32, %arg1 : i32, i32
  }
  func.func @transform_3(%arg0: i32, %arg1: i32, %arg2: i32) -> (i32, i32) {
    %c0_i32 = arith.constant 0 : i32
    %c0_i32_0 = arith.constant 0 : i32
    return %c0_i32, %arg1 : i32, i32
  }
  func.func @transform_4(%arg0: i32, %arg1: i32, %arg2: i32) -> (i32, i32) {
    %c0_i32 = arith.constant 0 : i32
    return %arg0, %arg1 : i32, i32
  }
}

</mosaic_0001>

<llo_original>
// kernel: tpu_custom_call.1
$region0: #{tpu_custom_call.1}
  #allocation0 [shape = 'u32[]', space=smem, size = 0x4, offset = 0x4, fixed_abs, tag = 'smem constant byte address 0x4 - core index']
  #allocation1 [shape = 'u32[144,128]{1,0:T(1,128)}', space=vmem, size = 0x12000, scoped, tag = 'internal scratch']
  #allocation2 [shape = 'f32[512,128]{1,0:T(8,128)}', space=vmem, size = 0x40000, scoped, tag = 'scratch operand']
  %s0 = inlined_call_operand.hbm [shape: f32[512,256], index: 0, kind: input, shape index: {}]
  %s1 = inlined_call_operand.hbm [shape: bf16[256,128], index: 1, kind: input, shape index: {}]
  %s2 = inlined_call_operand.vmem [shape: f32[1,128], index: 2, kind: input, shape index: {}]
  %s3 = inlined_call_operand.vmem [shape: f32[1,128], index: 3, kind: input, shape index: {}]
  %s4 = inlined_call_operand.hbm [shape: f32[512,128], index: 4, kind: output, shape index: {}]
  %s5 = sld [smem:[#allocation0]]
  $region42: #{tpu_custom_call.1} parent=0
    _
  %s7 = ssub.s32 1, %s5
  %s8 = scalar_select 0, %s7, %s5
  $region1: #{tpu_custom_call.1} parent=0
    #allocation3 [shape = 'u8[524288]{0}', space=vmem, size = 0x80000, scoped, tag = 'input window, operand 0, single buffered']
    #allocation4 [shape = 's32[1]{0}', space=sflag, size = 0x4, scoped, tag = 'scoped memory for tpu_custom_call.1']
    #allocation5 [shape = 's32[1]{0}', space=sflag, size = 0x4, scoped, tag = 'scoped memory for tpu_custom_call.1']
    #allocation6 [shape = 'u8[65536]{0}', space=vmem, size = 0x10000, scoped, tag = 'input window, operand 1, single buffered']
    #allocation7 [shape = 's32[1]{0}', space=sflag, size = 0x4, scoped, tag = 'scoped memory for tpu_custom_call.1']
    #allocation8 [shape = 'u8[262144]{0}', space=vmem, size = 0x40000, scoped, tag = 'output window, operand 0, single buffered']
    %9 = vsyncpa [#allocation4], 0
    %10 = vsyncpa [#allocation7], 0
    %11 = vsyncpa [#allocation5], 0
    // Predicated region
    $region2: #{tpu_custom_call.1} parent=1 // pred_check
      _
    $region3: #{tpu_custom_call.1} parent=1 // pred_check_branch
      %13 = sbr.rel (0) target = $region5
    $region4: #{tpu_custom_call.1} parent=1 // pred_region
      %s15 = ssub.s32 16384, 16384
      %16 = vsyncadd [#allocation4], %s15
      %s17 = sshll.u32 [#allocation3], 4
      %s18 = int_to_ptr.vmem [resolvable:$true] %s17
      %23 = dma.hbm_to_vmem [thread:$0]  %s0, 16384, %s18, [#allocation4], 256, 256, 16
    $region5: #{tpu_custom_call.1} parent=1 // pred_fallthru
      _
    // Predicated region
    $region6: #{tpu_custom_call.1} parent=1 // pred_check
      _
    $region7: #{tpu_custom_call.1} parent=1 // pred_check_branch
      %25 = sbr.rel (0) target = $region9
    $region8: #{tpu_custom_call.1} parent=1 // pred_region
      %s27 = ssub.s32 2048, 2048
      %28 = vsyncadd [#allocation7], %s27
      %s29 = sshll.u32 [#allocation6], 4
      %s30 = int_to_ptr.vmem [resolvable:$true] %s29
      %35 = dma.hbm_to_vmem [thread:$0]  %s1, 2048, %s30, [#allocation7], 64, 64, 4
    $region9: #{tpu_custom_call.1} parent=1 // pred_fallthru
      _
    // Predicated region
    $region10: #{tpu_custom_call.1} parent=1 // pred_check
      _
    $region11: #{tpu_custom_call.1} parent=1 // pred_check_branch
      %37 = sbr.rel (0) target = $region13
    $region12: #{tpu_custom_call.1} parent=1 // pred_region
      _
    $region13: #{tpu_custom_call.1} parent=1 // pred_fallthru
      _
    // Predicated region
    $region14: #{tpu_custom_call.1} parent=1 // pred_check
      _
    $region15: #{tpu_custom_call.1} parent=1 // pred_check_branch
      %39 = sbr.rel (0) target = $region17
    $region16: #{tpu_custom_call.1} parent=1 // pred_region
      _
    $region17: #{tpu_custom_call.1} parent=1 // pred_fallthru
      _
    // Predicated region
    $region18: #{tpu_custom_call.1} parent=1 // pred_check
      _
    $region19: #{tpu_custom_call.1} parent=1 // pred_check_branch
      %41 = sbr.rel (0) target = $region21
    $region20: #{tpu_custom_call.1} parent=1 // pred_region
      %42 = dma.done [#allocation4], 16384
    $region21: #{tpu_custom_call.1} parent=1 // pred_fallthru
      _
    // Predicated region
    $region22: #{tpu_custom_call.1} parent=1 // pred_check
      _
    $region23: #{tpu_custom_call.1} parent=1 // pred_check_branch
      %44 = sbr.rel (0) target = $region25
    $region24: #{tpu_custom_call.1} parent=1 // pred_region
      %45 = dma.done [#allocation7], 2048
    $region25: #{tpu_custom_call.1} parent=1 // pred_fallthru
      _
    %p47 = scmp.eq.s32.totalorder 0, 0
    // Predicated region
    $region26: #{tpu_custom_call.1} parent=1 // pred_check
      %p48 = pneg %p47
    $region27: #{tpu_custom_call.1} parent=1 // pred_check_branch
      %50 = sbr.rel (%p48) target = $region29
    $region28: #{tpu_custom_call.1} parent=1 // pred_region
      %51 = vst [vmem:[#allocation2] sm:$0xff] 0.0
      %52 = vst [vmem:[#allocation2 + $0x8] sm:$0xff] 0.0
      %53 = vst [vmem:[#allocation2 + $0x10] sm:$0xff] 0.0
      %54 = vst [vmem:[#allocation2 + $0x18] sm:$0xff] 0.0
      %55 = vst [vmem:[#allocation2 + $0x20] sm:$0xff] 0.0
      %56 = vst [vmem:[#allocation2 + $0x28] sm:$0xff] 0.0
      %57 = vst [vmem:[#allocation2 + $0x30] sm:$0xff] 0.0
      %58 = vst [vmem:[#allocation2 + $0x38] sm:$0xff] 0.0
      %59 = vst [vmem:[#allocation2 + $0x40] sm:$0xff] 0.0
      %60 = vst [vmem:[#allocation2 + $0x48] sm:$0xff] 0.0
      %61 = vst [vmem:[#allocation2 + $0x50] sm:$0xff] 0.0
      %62 = vst [vmem:[#allocation2 + $0x58] sm:$0xff] 0.0
      %63 = vst [vmem:[#allocation2 + $0x60] sm:$0xff] 0.0
      %64 = vst [vmem:[#allocation2 + $0x68] sm:$0xff] 0.0
      %65 = vst [vmem:[#allocation2 + $0x70] sm:$0xff] 0.0
      %66 = vst [vmem:[#allocation2 + $0x78] sm:$0xff] 0.0
      %67 = vst [vmem:[#allocation2 + $0x80] sm:$0xff] 0.0
      %68 = vst [vmem:[#allocation2 + $0x88] sm:$0xff] 0.0
      %69 = vst [vmem:[#allocation2 + $0x90] sm:$0xff] 0.0
      %70 = vst [vmem:[#allocation2 + $0x98] sm:$0xff] 0.0
      %71 = vst [vmem:[#allocation2 + $0xa0] sm:$0xff] 0.0
      %72 = vst [vmem:[#allocation2 + $0xa8] sm:$0xff] 0.0
      %73 = vst [vmem:[#allocation2 + $0xb0] sm:$0xff] 0.0
      %74 = vst [vmem:[#allocation2 + $0xb8] sm:$0xff] 0.0
      %75 = vst [vmem:[#allocation2 + $0xc0] sm:$0xff] 0.0
      %76 = vst [vmem:[#allocation2 + $0xc8] sm:$0xff] 0.0
      %77 = vst [vmem:[#allocation2 + $0xd0] sm:$0xff] 0.0
      %78 = vst [vmem:[#allocation2 + $0xd8] sm:$0xff] 0.0
      %79 = vst [vmem:[#allocation2 + $0xe0] sm:$0xff] 0.0
      %80 = vst [vmem:[#allocation2 + $0xe8] sm:$0xff] 0.0
      %81 = vst [vmem:[#allocation2 + $0xf0] sm:$0xff] 0.0
      %82 = vst [vmem:[#allocation2 + $0xf8] sm:$0xff] 0.0
      %83 = vst [vmem:[#allocation2 + $0x100] sm:$0xff] 0.0
      %84 = vst [vmem:[#allocation2 + $0x108] sm:$0xff] 0.0
      %85 = vst [vmem:[#allocation2 + $0x110] sm:$0xff] 0.0
      %86 = vst [vmem:[#allocation2 + $0x118] sm:$0xff] 0.0
      %87 = vst [vmem:[#allocation2 + $0x120] sm:$0xff] 0.0
      %88 = vst [vmem:[#allocation2 + $0x128] sm:$0xff] 0.0
      %89 = vst [vmem:[#allocation2 + $0x130] sm:$0xff] 0.0
      %90 = vst [vmem:[#allocation2 + $0x138] sm:$0xff] 0.0
      %91 = vst [vmem:[#allocation2 + $0x140] sm:$0xff] 0.0
      %92 = vst [vmem:[#allocation2 + $0x148] sm:$0xff] 0.0
      %93 = vst [vmem:[#allocation2 + $0x150] sm:$0xff] 0.0
      %94 = vst [vmem:[#allocation2 + $0x158] sm:$0xff] 0.0
      %95 = vst [vmem:[#allocation2 + $0x160] sm:$0xff] 0.0
      %96 = vst [vmem:[#allocation2 + $0x168] sm:$0xff] 0.0
      %97 = vst [vmem:[#allocation2 + $0x170] sm:$0xff] 0.0
      %98 = vst [vmem:[#allocation2 + $0x178] sm:$0xff] 0.0
      %99 = vst [vmem:[#allocation2 + $0x180] sm:$0xff] 0.0
      %100 = vst [vmem:[#allocation2 + $0x188] sm:$0xff] 0.0
      %101 = vst [vmem:[#allocation2 + $0x190] sm:$0xff] 0.0
      %102 = vst [vmem:[#allocation2 + $0x198] sm:$0xff] 0.0
      %103 = vst [vmem:[#allocation2 + $0x1a0] sm:$0xff] 0.0
      %104 = vst [vmem:[#allocation2 + $0x1a8] sm:$0xff] 0.0
      %105 = vst [vmem:[#allocation2 + $0x1b0] sm:$0xff] 0.0
      %106 = vst [vmem:[#allocation2 + $0x1b8] sm:$0xff] 0.0
      %107 = vst [vmem:[#allocation2 + $0x1c0] sm:$0xff] 0.0
      %108 = vst [vmem:[#allocation2 + $0x1c8] sm:$0xff] 0.0
      %109 = vst [vmem:[#allocation2 + $0x1d0] sm:$0xff] 0.0
      %110 = vst [vmem:[#allocation2 + $0x1d8] sm:$0xff] 0.0
      %111 = vst [vmem:[#allocation2 + $0x1e0] sm:$0xff] 0.0
      %112 = vst [vmem:[#allocation2 + $0x1e8] sm:$0xff] 0.0
      %113 = vst [vmem:[#allocation2 + $0x1f0] sm:$0xff] 0.0
      %114 = vst [vmem:[#allocation2 + $0x1f8] sm:$0xff] 0.0
    $region29: #{tpu_custom_call.1} parent=1 // pred_fallthru
      _
    %v115 = vld [vmem:[#allocation3] sm:$0xff]
    %v116 = vld [vmem:[#allocation3 + $0x8] sm:$0xff]
    %v117 = vld [vmem:[#allocation3 + $0x10] sm:$0xff]
    %v118 = vld [vmem:[#allocation3 + $0x18] sm:$0xff]
    %v119 = vld [vmem:[#allocation3 + $0x20] sm:$0xff]
    %v120 = vld [vmem:[#allocation3 + $0x28] sm:$0xff]
    %v121 = vld [vmem:[#allocation3 + $0x30] sm:$0xff]
    %v122 = vld [vmem:[#allocation3 + $0x38] sm:$0xff]
    %v123 = vld [vmem:[#allocation3 + $0x40] sm:$0xff]
    %v124 = vld [vmem:[#allocation3 + $0x48] sm:$0xff]
    %v125 = vld [vmem:[#allocation3 + $0x50] sm:$0xff]
    %v126 = vld [vmem:[#allocation3 + $0x58] sm:$0xff]
    %v127 = vld [vmem:[#allocation3 + $0x60] sm:$0xff]
    %v128 = vld [vmem:[#allocation3 + $0x68] sm:$0xff]
    %v129 = vld [vmem:[#allocation3 + $0x70] sm:$0xff]
    %v130 = vld [vmem:[#allocation3 + $0x78] sm:$0xff]
    %v131 = vld [vmem:[#allocation3 + $0x80] sm:$0xff]
    %v132 = vld [vmem:[#allocation3 + $0x88] sm:$0xff]
    %v133 = vld [vmem:[#allocation3 + $0x90] sm:$0xff]
    %v134 = vld [vmem:[#allocation3 + $0x98] sm:$0xff]
    %v135 = vld [vmem:[#allocation3 + $0xa0] sm:$0xff]
    %v136 = vld [vmem:[#allocation3 + $0xa8] sm:$0xff]
    %v137 = vld [vmem:[#allocation3 + $0xb0] sm:$0xff]
    %v138 = vld [vmem:[#allocation3 + $0xb8] sm:$0xff]
    %v139 = vld [vmem:[#allocation3 + $0xc0] sm:$0xff]
    %v140 = vld [vmem:[#allocation3 + $0xc8] sm:$0xff]
    %v141 = vld [vmem:[#allocation3 + $0xd0] sm:$0xff]
    %v142 = vld [vmem:[#allocation3 + $0xd8] sm:$0xff]
    %v143 = vld [vmem:[#allocation3 + $0xe0] sm:$0xff]
    %v144 = vld [vmem:[#allocation3 + $0xe8] sm:$0xff]
    %v145 = vld [vmem:[#allocation3 + $0xf0] sm:$0xff]
    %v146 = vld [vmem:[#allocation3 + $0xf8] sm:$0xff]
    %v147 = vld [vmem:[#allocation3 + $0x100] sm:$0xff]
    %v148 = vld [vmem:[#allocation3 + $0x108] sm:$0xff]
    %v149 = vld [vmem:[#allocation3 + $0x110] sm:$0xff]
    %v150 = vld [vmem:[#allocation3 + $0x118] sm:$0xff]
    %v151 = vld [vmem:[#allocation3 + $0x120] sm:$0xff]
    %v152 = vld [vmem:[#allocation3 + $0x128] sm:$0xff]
    %v153 = vld [vmem:[#allocation3 + $0x130] sm:$0xff]
    %v154 = vld [vmem:[#allocation3 + $0x138] sm:$0xff]
    %v155 = vld [vmem:[#allocation3 + $0x140] sm:$0xff]
    %v156 = vld [vmem:[#allocation3 + $0x148] sm:$0xff]
    %v157 = vld [vmem:[#allocation3 + $0x150] sm:$0xff]
    %v158 = vld [vmem:[#allocation3 + $0x158] sm:$0xff]
    %v159 = vld [vmem:[#allocation3 + $0x160] sm:$0xff]
    %v160 = vld [vmem:[#allocation3 + $0x168] sm:$0xff]
    %v161 = vld [vmem:[#allocation3 + $0x170] sm:$0xff]
    %v162 = vld [vmem:[#allocation3 + $0x178] sm:$0xff]
    %v163 = vld [vmem:[#allocation3 + $0x180] sm:$0xff]
    %v164 = vld [vmem:[#allocation3 + $0x188] sm:$0xff]
    %v165 = vld [vmem:[#allocation3 + $0x190] sm:$0xff]
    %v166 = vld [vmem:[#allocation3 + $0x198] sm:$0xff]
    %v167 = vld [vmem:[#allocation3 + $0x1a0] sm:$0xff]
    %v168 = vld [vmem:[#allocation3 + $0x1a8] sm:$0xff]
    %v169 = vld [vmem:[#allocation3 + $0x1b0] sm:$0xff]
    %v170 = vld [vmem:[#allocation3 + $0x1b8] sm:$0xff]
    %v171 = vld [vmem:[#allocation3 + $0x1c0] sm:$0xff]
    %v172 = vld [vmem:[#allocation3 + $0x1c8] sm:$0xff]
    %v173 = vld [vmem:[#allocation3 + $0x1d0] sm:$0xff]
    %v174 = vld [vmem:[#allocation3 + $0x1d8] sm:$0xff]
    %v175 = vld [vmem:[#allocation3 + $0x1e0] sm:$0xff]
    %v176 = vld [vmem:[#allocation3 + $0x1e8] sm:$0xff]
    %v177 = vld [vmem:[#allocation3 + $0x1f0] sm:$0xff]
    %v178 = vld [vmem:[#allocation3 + $0x1f8] sm:$0xff]
    %v179 = vld [vmem:[#allocation3 + $0x200] sm:$0xff]
    %v180 = vld [vmem:[#allocation3 + $0x208] sm:$0xff]
    %v181 = vld [vmem:[#allocation3 + $0x210] sm:$0xff]
    %v182 = vld [vmem:[#allocation3 + $0x218] sm:$0xff]
    %v183 = vld [vmem:[#allocation3 + $0x220] sm:$0xff]
    %v184 = vld [vmem:[#allocation3 + $0x228] sm:$0xff]
    %v185 = vld [vmem:[#allocation3 + $0x230] sm:$0xff]
    %v186 = vld [vmem:[#allocation3 + $0x238] sm:$0xff]
    %v187 = vld [vmem:[#allocation3 + $0x240] sm:$0xff]
    %v188 = vld [vmem:[#allocation3 + $0x248] sm:$0xff]
    %v189 = vld [vmem:[#allocation3 + $0x250] sm:$0xff]
    %v190 = vld [vmem:[#allocation3 + $0x258] sm:$0xff]
    %v191 = vld [vmem:[#allocation3 + $0x260] sm:$0xff]
    %v192 = vld [vmem:[#allocation3 + $0x268] sm:$0xff]
    %v193 = vld [vmem:[#allocation3 + $0x270] sm:$0xff]
    %v194 = vld [vmem:[#allocation3 + $0x278] sm:$0xff]
    %v195 = vld [vmem:[#allocation3 + $0x280] sm:$0xff]
    %v196 = vld [vmem:[#allocation3 + $0x288] sm:$0xff]
    %v197 = vld [vmem:[#allocation3 + $0x290] sm:$0xff]
    %v198 = vld [vmem:[#allocation3 + $0x298] sm:$0xff]
    %v199 = vld [vmem:[#allocation3 + $0x2a0] sm:$0xff]
    %v200 = vld [vmem:[#allocation3 + $0x2a8] sm:$0xff]
    %v201 = vld [vmem:[#allocation3 + $0x2b0] sm:$0xff]
    %v202 = vld [vmem:[#allocation3 + $0x2b8] sm:$0xff]
    %v203 = vld [vmem:[#allocation3 + $0x2c0] sm:$0xff]
    %v204 = vld [vmem:[#allocation3 + $0x2c8] sm:$0xff]
    %v205 = vld [vmem:[#allocation3 + $0x2d0] sm:$0xff]
    %v206 = vld [vmem:[#allocation3 + $0x2d8] sm:$0xff]
    %v207 = vld [vmem:[#allocation3 + $0x2e0] sm:$0xff]
    %v208 = vld [vmem:[#allocation3 + $0x2e8] sm:$0xff]
    %v209 = vld [vmem:[#allocation3 + $0x2f0] sm:$0xff]
    %v210 = vld [vmem:[#allocation3 + $0x2f8] sm:$0xff]
    %v211 = vld [vmem:[#allocation3 + $0x300] sm:$0xff]
    %v212 = vld [vmem:[#allocation3 + $0x308] sm:$0xff]
    %v213 = vld [vmem:[#allocation3 + $0x310] sm:$0xff]
    %v214 = vld [vmem:[#allocation3 + $0x318] sm:$0xff]
    %v215 = vld [vmem:[#allocation3 + $0x320] sm:$0xff]
    %v216 = vld [vmem:[#allocation3 + $0x328] sm:$0xff]
    %v217 = vld [vmem:[#allocation3 + $0x330] sm:$0xff]
    %v218 = vld [vmem:[#allocation3 + $0x338] sm:$0xff]
    %v219 = vld [vmem:[#allocation3 + $0x340] sm:$0xff]
    %v220 = vld [vmem:[#allocation3 + $0x348] sm:$0xff]
    %v221 = vld [vmem:[#allocation3 + $0x350] sm:$0xff]
    %v222 = vld [vmem:[#allocation3 + $0x358] sm:$0xff]
    %v223 = vld [vmem:[#allocation3 + $0x360] sm:$0xff]
    %v224 = vld [vmem:[#allocation3 + $0x368] sm:$0xff]
    %v225 = vld [vmem:[#allocation3 + $0x370] sm:$0xff]
    %v226 = vld [vmem:[#allocation3 + $0x378] sm:$0xff]
    %v227 = vld [vmem:[#allocation3 + $0x380] sm:$0xff]
    %v228 = vld [vmem:[#allocation3 + $0x388] sm:$0xff]
    %v229 = vld [vmem:[#allocation3 + $0x390] sm:$0xff]
    %v230 = vld [vmem:[#allocation3 + $0x398] sm:$0xff]
    %v231 = vld [vmem:[#allocation3 + $0x3a0] sm:$0xff]
    %v232 = vld [vmem:[#allocation3 + $0x3a8] sm:$0xff]
    %v233 = vld [vmem:[#allocation3 + $0x3b0] sm:$0xff]
    %v234 = vld [vmem:[#allocation3 + $0x3b8] sm:$0xff]
    %v235 = vld [vmem:[#allocation3 + $0x3c0] sm:$0xff]
    %v236 = vld [vmem:[#allocation3 + $0x3c8] sm:$0xff]
    %v237 = vld [vmem:[#allocation3 + $0x3d0] sm:$0xff]
    %v238 = vld [vmem:[#allocation3 + $0x3d8] sm:$0xff]
    %v239 = vld [vmem:[#allocation3 + $0x3e0] sm:$0xff]
    %v240 = vld [vmem:[#allocation3 + $0x3e8] sm:$0xff]
    %v241 = vld [vmem:[#allocation3 + $0x3f0] sm:$0xff]
    %v242 = vld [vmem:[#allocation3 + $0x3f8] sm:$0xff]
    %v243 = vld [vmem:[#allocation2] sm:$0xff]
    %v244 = vld [vmem:[#allocation2 + $0x8] sm:$0xff]
    %v245 = vld [vmem:[#allocation2 + $0x10] sm:$0xff]
    %v246 = vld [vmem:[#allocation2 + $0x18] sm:$0xff]
    %v247 = vld [vmem:[#allocation2 + $0x20] sm:$0xff]
    %v248 = vld [vmem:[#allocation2 + $0x28] sm:$0xff]
    %v249 = vld [vmem:[#allocation2 + $0x30] sm:$0xff]
    %v250 = vld [vmem:[#allocation2 + $0x38] sm:$0xff]
    %v251 = vld [vmem:[#allocation2 + $0x40] sm:$0xff]
    %v252 = vld [vmem:[#allocation2 + $0x48] sm:$0xff]
    %v253 = vld [vmem:[#allocation2 + $0x50] sm:$0xff]
    %v254 = vld [vmem:[#allocation2 + $0x58] sm:$0xff]
    %v255 = vld [vmem:[#allocation2 + $0x60] sm:$0xff]
    %v256 = vld [vmem:[#allocation2 + $0x68] sm:$0xff]
    %v257 = vld [vmem:[#allocation2 + $0x70] sm:$0xff]
    %v258 = vld [vmem:[#allocation2 + $0x78] sm:$0xff]
    %v259 = vld [vmem:[#allocation2 + $0x80] sm:$0xff]
    %v260 = vld [vmem:[#allocation2 + $0x88] sm:$0xff]
    %v261 = vld [vmem:[#allocation2 + $0x90] sm:$0xff]
    %v262 = vld [vmem:[#allocation2 + $0x98] sm:$0xff]
    %v263 = vld [vmem:[#allocation2 + $0xa0] sm:$0xff]
    %v264 = vld [vmem:[#allocation2 + $0xa8] sm:$0xff]
    %v265 = vld [vmem:[#allocation2 + $0xb0] sm:$0xff]
    %v266 = vld [vmem:[#allocation2 + $0xb8] sm:$0xff]
    %v267 = vld [vmem:[#allocation2 + $0xc0] sm:$0xff]
    %v268 = vld [vmem:[#allocation2 + $0xc8] sm:$0xff]
    %v269 = vld [vmem:[#allocation2 + $0xd0] sm:$0xff]
    %v270 = vld [vmem:[#allocation2 + $0xd8] sm:$0xff]
    %v271 = vld [vmem:[#allocation2 + $0xe0] sm:$0xff]
    %v272 = vld [vmem:[#allocation2 + $0xe8] sm:$0xff]
    %v273 = vld [vmem:[#allocation2 + $0xf0] sm:$0xff]
    %v274 = vld [vmem:[#allocation2 + $0xf8] sm:$0xff]
    %v275 = vld [vmem:[#allocation2 + $0x100] sm:$0xff]
    %v276 = vld [vmem:[#allocation2 + $0x108] sm:$0xff]
    %v277 = vld [vmem:[#allocation2 + $0x110] sm:$0xff]
    %v278 = vld [vmem:[#allocation2 + $0x118] sm:$0xff]
    %v279 = vld [vmem:[#allocation2 + $0x120] sm:$0xff]
    %v280 = vld [vmem:[#allocation2 + $0x128] sm:$0xff]
    %v281 = vld [vmem:[#allocation2 + $0x130] sm:$0xff]
    %v282 = vld [vmem:[#allocation2 + $0x138] sm:$0xff]
    %v283 = vld [vmem:[#allocation2 + $0x140] sm:$0xff]
    %v284 = vld [vmem:[#allocation2 + $0x148] sm:$0xff]
    %v285 = vld [vmem:[#allocation2 + $0x150] sm:$0xff]
    %v286 = vld [vmem:[#allocation2 + $0x158] sm:$0xff]
    %v287 = vld [vmem:[#allocation2 + $0x160] sm:$0xff]
    %v288 = vld [vmem:[#allocation2 + $0x168] sm:$0xff]
    %v289 = vld [vmem:[#allocation2 + $0x170] sm:$0xff]
    %v290 = vld [vmem:[#allocation2 + $0x178] sm:$0xff]
    %v291 = vld [vmem:[#allocation2 + $0x180] sm:$0xff]
    %v292 = vld [vmem:[#allocation2 + $0x188] sm:$0xff]
    %v293 = vld [vmem:[#allocation2 + $0x190] sm:$0xff]
    %v294 = vld [vmem:[#allocation2 + $0x198] sm:$0xff]
    %v295 = vld [vmem:[#allocation2 + $0x1a0] sm:$0xff]
    %v296 = vld [vmem:[#allocation2 + $0x1a8] sm:$0xff]
    %v297 = vld [vmem:[#allocation2 + $0x1b0] sm:$0xff]
    %v298 = vld [vmem:[#allocation2 + $0x1b8] sm:$0xff]
    %v299 = vld [vmem:[#allocation2 + $0x1c0] sm:$0xff]
    %v300 = vld [vmem:[#allocation2 + $0x1c8] sm:$0xff]
    %v301 = vld [vmem:[#allocation2 + $0x1d0] sm:$0xff]
    %v302 = vld [vmem:[#allocation2 + $0x1d8] sm:$0xff]
    %v303 = vld [vmem:[#allocation2 + $0x1e0] sm:$0xff]
    %v304 = vld [vmem:[#allocation2 + $0x1e8] sm:$0xff]
    %v305 = vld [vmem:[#allocation2 + $0x1f0] sm:$0xff]
    %v306 = vld [vmem:[#allocation2 + $0x1f8] sm:$0xff]
    %v307 = vpack.c.bf16 %v117, %v115
    %v308 = vpack.c.bf16 %v118, %v116
    %v309 = vpack.c.bf16 %v121, %v119
    %v310 = vpack.c.bf16 %v122, %v120
    %v311 = vpack.c.bf16 %v125, %v123
    %v312 = vpack.c.bf16 %v126, %v124
    %v313 = vpack.c.bf16 %v129, %v127
    %v314 = vpack.c.bf16 %v130, %v128
    %v315 = vpack.c.bf16 %v133, %v131
    %v316 = vpack.c.bf16 %v134, %v132
    %v317 = vpack.c.bf16 %v137, %v135
    %v318 = vpack.c.bf16 %v138, %v136
    %v319 = vpack.c.bf16 %v141, %v139
    %v320 = vpack.c.bf16 %v142, %v140
    %v321 = vpack.c.bf16 %v145, %v143
    %v322 = vpack.c.bf16 %v146, %v144
    %v323 = vpack.c.bf16 %v149, %v147
    %v324 = vpack.c.bf16 %v150, %v148
    %v325 = vpack.c.bf16 %v153, %v151
    %v326 = vpack.c.bf16 %v154, %v152
    %v327 = vpack.c.bf16 %v157, %v155
    %v328 = vpack.c.bf16 %v158, %v156
    %v329 = vpack.c.bf16 %v161, %v159
    %v330 = vpack.c.bf16 %v162, %v160
    %v331 = vpack.c.bf16 %v165, %v163
    %v332 = vpack.c.bf16 %v166, %v164
    %v333 = vpack.c.bf16 %v169, %v167
    %v334 = vpack.c.bf16 %v170, %v168
    %v335 = vpack.c.bf16 %v173, %v171
    %v336 = vpack.c.bf16 %v174, %v172
    %v337 = vpack.c.bf16 %v177, %v175
    %v338 = vpack.c.bf16 %v178, %v176
    %v339 = vpack.c.bf16 %v181, %v179
    %v340 = vpack.c.bf16 %v182, %v180
    %v341 = vpack.c.bf16 %v185, %v183
    %v342 = vpack.c.bf16 %v186, %v184
    %v343 = vpack.c.bf16 %v189, %v187
    %v344 = vpack.c.bf16 %v190, %v188
    %v345 = vpack.c.bf16 %v193, %v191
    %v346 = vpack.c.bf16 %v194, %v192
    %v347 = vpack.c.bf16 %v197, %v195
    %v348 = vpack.c.bf16 %v198, %v196
    %v349 = vpack.c.bf16 %v201, %v199
    %v350 = vpack.c.bf16 %v202, %v200
    %v351 = vpack.c.bf16 %v205, %v203
    %v352 = vpack.c.bf16 %v206, %v204
    %v353 = vpack.c.bf16 %v209, %v207
    %v354 = vpack.c.bf16 %v210, %v208
    %v355 = vpack.c.bf16 %v213, %v211
    %v356 = vpack.c.bf16 %v214, %v212
    %v357 = vpack.c.bf16 %v217, %v215
    %v358 = vpack.c.bf16 %v218, %v216
    %v359 = vpack.c.bf16 %v221, %v219
    %v360 = vpack.c.bf16 %v222, %v220
    %v361 = vpack.c.bf16 %v225, %v223
    %v362 = vpack.c.bf16 %v226, %v224
    %v363 = vpack.c.bf16 %v229, %v227
    %v364 = vpack.c.bf16 %v230, %v228
    %v365 = vpack.c.bf16 %v233, %v231
    %v366 = vpack.c.bf16 %v234, %v232
    %v367 = vpack.c.bf16 %v237, %v235
    %v368 = vpack.c.bf16 %v238, %v236
    %v369 = vpack.c.bf16 %v241, %v239
    %v370 = vpack.c.bf16 %v242, %v240
    %v371 = vld [vmem:[#allocation6] sm:$0xf]
    %v372 = vld [vmem:[#allocation6 + $0x4] sm:$0xf]
    %v373 = vld [vmem:[#allocation6 + $0x8] sm:$0xf]
    %v374 = vld [vmem:[#allocation6 + $0xc] sm:$0xf]
    %v375 = vld [vmem:[#allocation6 + $0x10] sm:$0xf]
    %v376 = vld [vmem:[#allocation6 + $0x14] sm:$0xf]
    %v377 = vld [vmem:[#allocation6 + $0x18] sm:$0xf]
    %v378 = vld [vmem:[#allocation6 + $0x1c] sm:$0xf]
    %v379 = vld [vmem:[#allocation6 + $0x20] sm:$0xf]
    %v380 = vld [vmem:[#allocation6 + $0x24] sm:$0xf]
    %v381 = vld [vmem:[#allocation6 + $0x28] sm:$0xf]
    %v382 = vld [vmem:[#allocation6 + $0x2c] sm:$0xf]
    %v383 = vld [vmem:[#allocation6 + $0x30] sm:$0xf]
    %v384 = vld [vmem:[#allocation6 + $0x34] sm:$0xf]
    %v385 = vld [vmem:[#allocation6 + $0x38] sm:$0xf]
    %v386 = vld [vmem:[#allocation6 + $0x3c] sm:$0xf]
    %v387 = vld [vmem:[#allocation6 + $0x40] sm:$0xf]
    %v388 = vld [vmem:[#allocation6 + $0x44] sm:$0xf]
    %v389 = vld [vmem:[#allocation6 + $0x48] sm:$0xf]
    %v390 = vld [vmem:[#allocation6 + $0x4c] sm:$0xf]
    %v391 = vld [vmem:[#allocation6 + $0x50] sm:$0xf]
    %v392 = vld [vmem:[#allocation6 + $0x54] sm:$0xf]
    %v393 = vld [vmem:[#allocation6 + $0x58] sm:$0xf]
    %v394 = vld [vmem:[#allocation6 + $0x5c] sm:$0xf]
    %v395 = vld [vmem:[#allocation6 + $0x60] sm:$0xf]
    %v396 = vld [vmem:[#allocation6 + $0x64] sm:$0xf]
    %v397 = vld [vmem:[#allocation6 + $0x68] sm:$0xf]
    %v398 = vld [vmem:[#allocation6 + $0x6c] sm:$0xf]
    %v399 = vld [vmem:[#allocation6 + $0x70] sm:$0xf]
    %v400 = vld [vmem:[#allocation6 + $0x74] sm:$0xf]
    %v401 = vld [vmem:[#allocation6 + $0x78] sm:$0xf]
    %v402 = vld [vmem:[#allocation6 + $0x7c] sm:$0xf]
    %v435 = vunpack.c.l.b16 %v371
    %v436 = vunpack.c.l.b16 %v372
    %v437 = vunpack.c.l.b16 %v373
    %v438 = vunpack.c.l.b16 %v374
    %v439 = vunpack.c.l.b16 %v375
    %v440 = vunpack.c.l.b16 %v376
    %v441 = vunpack.c.l.b16 %v377
    %v442 = vunpack.c.l.b16 %v378
    %v443 = vunpack.c.l.b16 %v379
    %v444 = vunpack.c.l.b16 %v380
    %v445 = vunpack.c.l.b16 %v381
    %v446 = vunpack.c.l.b16 %v382
    %v447 = vunpack.c.l.b16 %v383
    %v448 = vunpack.c.l.b16 %v384
    %v449 = vunpack.c.l.b16 %v385
    %v450 = vunpack.c.l.b16 %v386
    %v451 = vunpack.c.l.b16 %v387
    %v452 = vunpack.c.l.b16 %v388
    %v453 = vunpack.c.l.b16 %v389
    %v454 = vunpack.c.l.b16 %v390
    %v455 = vunpack.c.l.b16 %v391
    %v456 = vunpack.c.l.b16 %v392
    %v457 = vunpack.c.l.b16 %v393
    %v458 = vunpack.c.l.b16 %v394
    %v459 = vunpack.c.l.b16 %v395
    %v460 = vunpack.c.l.b16 %v396
    %v461 = vunpack.c.l.b16 %v397
    %v462 = vunpack.c.l.b16 %v398
    %v463 = vunpack.c.l.b16 %v399
    %v464 = vunpack.c.l.b16 %v400
    %v465 = vunpack.c.l.b16 %v401
    %v466 = vunpack.c.l.b16 %v402
    %v467 = vpack.c.b16 %v436, %v435
    %v468 = vpack.c.b16 %v438, %v437
    %v469 = vpack.c.b16 %v440, %v439
    %v470 = vpack.c.b16 %v442, %v441
    %v471 = vpack.c.b16 %v444, %v443
    %v472 = vpack.c.b16 %v446, %v445
    %v473 = vpack.c.b16 %v448, %v447
    %v474 = vpack.c.b16 %v450, %v449
    %v475 = vpack.c.b16 %v452, %v451
    %v476 = vpack.c.b16 %v454, %v453
    %v477 = vpack.c.b16 %v456, %v455
    %v478 = vpack.c.b16 %v458, %v457
    %v479 = vpack.c.b16 %v460, %v459
    %v480 = vpack.c.b16 %v462, %v461
    %v481 = vpack.c.b16 %v464, %v463
    %v482 = vpack.c.b16 %v466, %v465
    %499 = vmatprep.subr.bf16.mxu0 0
    %500 = vmatpush1.bf16.msra.mxu0 %v467
    %501 = vmatprep.subr.bf16.mxu0 0
    %502 = vmatpush1.bf16.msra.mxu0 %v468
    %503 = vmatprep.subr.bf16.mxu0 0
    %504 = vmatpush1.bf16.msra.mxu0 %v469
    %505 = vmatprep.subr.bf16.mxu0 0
    %506 = vmatpush1.bf16.msra.mxu0 %v470
    %507 = vmatprep.subr.bf16.mxu0 0
    %508 = vmatpush1.bf16.msra.mxu0 %v471
    %509 = vmatprep.subr.bf16.mxu0 0
    %510 = vmatpush1.bf16.msra.mxu0 %v472
    %511 = vmatprep.subr.bf16.mxu0 0
    %512 = vmatpush1.bf16.msra.mxu0 %v473
    %513 = vmatprep.subr.bf16.mxu0 0
    %514 = vmatpush1.bf16.msra.mxu0 %v474
    %515 = vmatprep.subr.bf16.mxu0 0
    %516 = vmatpush1.bf16.msra.mxu0 %v475
    %517 = vmatprep.subr.bf16.mxu0 0
    %518 = vmatpush1.bf16.msra.mxu0 %v476
    %519 = vmatprep.subr.bf16.mxu0 0
    %520 = vmatpush1.bf16.msra.mxu0 %v477
    %521 = vmatprep.subr.bf16.mxu0 0
    %522 = vmatpush1.bf16.msra.mxu0 %v478
    %523 = vmatprep.subr.bf16.mxu0 0
    %524 = vmatpush1.bf16.msra.mxu0 %v479
    %525 = vmatprep.subr.bf16.mxu0 0
    %526 = vmatpush1.bf16.msra.mxu0 %v480
    %527 = vmatprep.subr.bf16.mxu0 0
    %528 = vmatpush1.bf16.msra.mxu0 %v481
    %529 = vmatprep.subr.bf16.mxu0 0
    %530 = vmatpush1.bf16.msra.mxu0 %v482
    %531 = vmatprep.mubr.bf16.mxu0 %v308
    %532 = vmatmul.mubr.bf16.gmra.mrb[0].mxu0 %v307
    %v533 = vpop.f32.mrb[0].mxu0
    %v534 = vadd.f32 0.0, %v533
    %v535 = vpop.f32.mrb[0].mxu0
    %v536 = vpop.f32.mrb[0].mxu0
    %v537 = vadd.f32 0.0, %v536
    %v538 = vpop.f32.mrb[0].mxu0
    %539 = vmatprep.mubr.bf16.mxu0 %v310
    %540 = vmatmul.mubr.bf16.gmra.mrb[0].mxu0 %v309
    %v541 = vpop.f32.mrb[0].mxu0
    %v542 = vadd.f32 0.0, %v541
    %v543 = vpop.f32.mrb[0].mxu0
    %v544 = vpop.f32.mrb[0].mxu0
    %v545 = vadd.f32 0.0, %v544
    %v546 = vpop.f32.mrb[0].mxu0
    %547 = vmatprep.mubr.bf16.mxu0 %v312
    %548 = vmatmul.mubr.bf16.gmra.mrb[0].mxu0 %v311
    %v549 = vpop.f32.mrb[0].mxu0
    %v550 = vadd.f32 0.0, %v549
    %v551 = vpop.f32.mrb[0].mxu0
    %v552 = vpop.f32.mrb[0].mxu0
    %v553 = vadd.f32 0.0, %v552
    %v554 = vpop.f32.mrb[0].mxu0
    %555 = vmatprep.mubr.bf16.mxu0 %v314
    %556 = vmatmul.mubr.bf16.gmra.mrb[0].mxu0 %v313
    %v557 = vpop.f32.mrb[0].mxu0
    %v558 = vadd.f32 0.0, %v557
    %v559 = vpop.f32.mrb[0].mxu0
    %v560 = vpop.f32.mrb[0].mxu0
    %v561 = vadd.f32 0.0, %v560
    %v562 = vpop.f32.mrb[0].mxu0
    %563 = vmatprep.mubr.bf16.mxu0 %v316
    %564 = vmatmul.mubr.bf16.gmra.mrb[0].mxu0 %v315
    %v565 = vpop.f32.mrb[0].mxu0
    %v566 = vadd.f32 0.0, %v565
    %v567 = vpop.f32.mrb[0].mxu0
    %v568 = vpop.f32.mrb[0].mxu0
    %v569 = vadd.f32 0.0, %v568
    %v570 = vpop.f32.mrb[0].mxu0
    %571 = vmatprep.mubr.bf16.mxu0 %v318
    %572 = vmatmul.mubr.bf16.gmra.mrb[0].mxu0 %v317
    %v573 = vpop.f32.mrb[0].mxu0
    %v574 = vadd.f32 0.0, %v573
    %v575 = vpop.f32.mrb[0].mxu0
    %v576 = vpop.f32.mrb[0].mxu0
    %v577 = vadd.f32 0.0, %v576
    %v578 = vpop.f32.mrb[0].mxu0
    %579 = vmatprep.mubr.bf16.mxu0 %v320
    %580 = vmatmul.mubr.bf16.gmra.mrb[0].mxu0 %v319
    %v581 = vpop.f32.mrb[0].mxu0
    %v582 = vadd.f32 0.0, %v581
    %v583 = vpop.f32.mrb[0].mxu0
    %v584 = vpop.f32.mrb[0].mxu0
    %v585 = vadd.f32 0.0, %v584
    %v586 = vpop.f32.mrb[0].mxu0
    %587 = vmatprep.mubr.bf16.mxu0 %v322
    %588 = vmatmul.mubr.bf16.gmra.mrb[0].mxu0 %v321
    %v589 = vpop.f32.mrb[0].mxu0
    %v590 = vadd.f32 0.0, %v589
    %v591 = vpop.f32.mrb[0].mxu0
    %v592 = vpop.f32.mrb[0].mxu0
    %v593 = vadd.f32 0.0, %v592
    %v594 = vpop.f32.mrb[0].mxu0
    %595 = vmatprep.mubr.bf16.mxu0 %v324
    %596 = vmatmul.mubr.bf16.gmra.mrb[0].mxu0 %v323
    %v597 = vpop.f32.mrb[0].mxu0
    %v598 = vadd.f32 0.0, %v597
    %v599 = vpop.f32.mrb[0].mxu0
    %v600 = vpop.f32.mrb[0].mxu0
    %v601 = vadd.f32 0.0, %v600
    %v602 = vpop.f32.mrb[0].mxu0
    %603 = vmatprep.mubr.bf16.mxu0 %v326
    %604 = vmatmul.mubr.bf16.gmra.mrb[0].mxu0 %v325
    %v605 = vpop.f32.mrb[0].mxu0
    %v606 = vadd.f32 0.0, %v605
    %v607 = vpop.f32.mrb[0].mxu0
    %v608 = vpop.f32.mrb[0].mxu0
    %v609 = vadd.f32 0.0, %v608
    %v610 = vpop.f32.mrb[0].mxu0
    %611 = vmatprep.mubr.bf16.mxu0 %v328
    %612 = vmatmul.mubr.bf16.gmra.mrb[0].mxu0 %v327
    %v613 = vpop.f32.mrb[0].mxu0
    %v614 = vadd.f32 0.0, %v613
    %v615 = vpop.f32.mrb[0].mxu0
    %v616 = vpop.f32.mrb[0].mxu0
    %v617 = vadd.f32 0.0, %v616
    %v618 = vpop.f32.mrb[0].mxu0
    %619 = vmatprep.mubr.bf16.mxu0 %v330
    %620 = vmatmul.mubr.bf16.gmra.mrb[0].mxu0 %v329
    %v621 = vpop.f32.mrb[0].mxu0
    %v622 = vadd.f32 0.0, %v621
    %v623 = vpop.f32.mrb[0].mxu0
    %v624 = vpop.f32.mrb[0].mxu0
    %v625 = vadd.f32 0.0, %v624
    %v626 = vpop.f32.mrb[0].mxu0
    %627 = vmatprep.mubr.bf16.mxu0 %v332
    %628 = vmatmul.mubr.bf16.gmra.mrb[0].mxu0 %v331
    %v629 = vpop.f32.mrb[0].mxu0
    %v630 = vadd.f32 0.0, %v629
    %v631 = vpop.f32.mrb[0].mxu0
    %v632 = vpop.f32.mrb[0].mxu0
    %v633 = vadd.f32 0.0, %v632
    %v634 = vpop.f32.mrb[0].mxu0
    %635 = vmatprep.mubr.bf16.mxu0 %v334
    %636 = vmatmul.mubr.bf16.gmra.mrb[0].mxu0 %v333
    %v637 = vpop.f32.mrb[0].mxu0
    %v638 = vadd.f32 0.0, %v637
    %v639 = vpop.f32.mrb[0].mxu0
    %v640 = vpop.f32.mrb[0].mxu0
    %v641 = vadd.f32 0.0, %v640
    %v642 = vpop.f32.mrb[0].mxu0
    %643 = vmatprep.mubr.bf16.mxu0 %v336
    %644 = vmatmul.mubr.bf16.gmra.mrb[0].mxu0 %v335
    %v645 = vpop.f32.mrb[0].mxu0
    %v646 = vadd.f32 0.0, %v645
    %v647 = vpop.f32.mrb[0].mxu0
    %v648 = vpop.f32.mrb[0].mxu0
    %v649 = vadd.f32 0.0, %v648
    %v650 = vpop.f32.mrb[0].mxu0
    %651 = vmatprep.mubr.bf16.mxu0 %v338
    %652 = vmatmul.mubr.bf16.gmra.mrb[0].mxu0 %v337
    %v653 = vpop.f32.mrb[0].mxu0
    %v654 = vadd.f32 0.0, %v653
    %v655 = vpop.f32.mrb[0].mxu0
    %v656 = vpop.f32.mrb[0].mxu0
    %v657 = vadd.f32 0.0, %v656
    %v658 = vpop.f32.mrb[0].mxu0
    %659 = vmatprep.mubr.bf16.mxu0 %v340
    %660 = vmatmul.mubr.bf16.gmra.mrb[0].mxu0 %v339
    %v661 = vpop.f32.mrb[0].mxu0
    %v662 = vadd.f32 0.0, %v661
    %v663 = vpop.f32.mrb[0].mxu0
    %v664 = vpop.f32.mrb[0].mxu0
    %v665 = vadd.f32 0.0, %v664
    %v666 = vpop.f32.mrb[0].mxu0
    %667 = vmatprep.mubr.bf16.mxu0 %v342
    %668 = vmatmul.mubr.bf16.gmra.mrb[0].mxu0 %v341
    %v669 = vpop.f32.mrb[0].mxu0
    %v670 = vadd.f32 0.0, %v669
    %v671 = vpop.f32.mrb[0].mxu0
    %v672 = vpop.f32.mrb[0].mxu0
    %v673 = vadd.f32 0.0, %v672
    %v674 = vpop.f32.mrb[0].mxu0
    %675 = vmatprep.mubr.bf16.mxu0 %v344
    %676 = vmatmul.mubr.bf16.gmra.mrb[0].mxu0 %v343
    %v677 = vpop.f32.mrb[0].mxu0
    %v678 = vadd.f32 0.0, %v677
    %v679 = vpop.f32.mrb[0].mxu0
    %v680 = vpop.f32.mrb[0].mxu0
    %v681 = vadd.f32 0.0, %v680
    %v682 = vpop.f32.mrb[0].mxu0
    %683 = vmatprep.mubr.bf16.mxu0 %v346
    %684 = vmatmul.mubr.bf16.gmra.mrb[0].mxu0 %v345
    %v685 = vpop.f32.mrb[0].mxu0
    %v686 = vadd.f32 0.0, %v685
    %v687 = vpop.f32.mrb[0].mxu0
    %v688 = vpop.f32.mrb[0].mxu0
    %v689 = vadd.f32 0.0, %v688
    %v690 = vpop.f32.mrb[0].mxu0
    %691 = vmatprep.mubr.bf16.mxu0 %v348
    %692 = vmatmul.mubr.bf16.gmra.mrb[0].mxu0 %v347
    %v693 = vpop.f32.mrb[0].mxu0
    %v694 = vadd.f32 0.0, %v693
    %v695 = vpop.f32.mrb[0].mxu0
    %v696 = vpop.f32.mrb[0].mxu0
    %v697 = vadd.f32 0.0, %v696
    %v698 = vpop.f32.mrb[0].mxu0
    %699 = vmatprep.mubr.bf16.mxu0 %v350
    %700 = vmatmul.mubr.bf16.gmra.mrb[0].mxu0 %v349
    %v701 = vpop.f32.mrb[0].mxu0
    %v702 = vadd.f32 0.0, %v701
    %v703 = vpop.f32.mrb[0].mxu0
    %v704 = vpop.f32.mrb[0].mxu0
    %v705 = vadd.f32 0.0, %v704
    %v706 = vpop.f32.mrb[0].mxu0
    %707 = vmatprep.mubr.bf16.mxu0 %v352
    %708 = vmatmul.mubr.bf16.gmra.mrb[0].mxu0 %v351
    %v709 = vpop.f32.mrb[0].mxu0
    %v710 = vadd.f32 0.0, %v709
    %v711 = vpop.f32.mrb[0].mxu0
    %v712 = vpop.f32.mrb[0].mxu0
    %v713 = vadd.f32 0.0, %v712
    %v714 = vpop.f32.mrb[0].mxu0
    %715 = vmatprep.mubr.bf16.mxu0 %v354
    %716 = vmatmul.mubr.bf16.gmra.mrb[0].mxu0 %v353
    %v717 = vpop.f32.mrb[0].mxu0
    %v718 = vadd.f32 0.0, %v717
    %v719 = vpop.f32.mrb[0].mxu0
    %v720 = vpop.f32.mrb[0].mxu0
    %v721 = vadd.f32 0.0, %v720
    %v722 = vpop.f32.mrb[0].mxu0
    %723 = vmatprep.mubr.bf16.mxu0 %v356
    %724 = vmatmul.mubr.bf16.gmra.mrb[0].mxu0 %v355
    %v725 = vpop.f32.mrb[0].mxu0
    %v726 = vadd.f32 0.0, %v725
    %v727 = vpop.f32.mrb[0].mxu0
    %v728 = vpop.f32.mrb[0].mxu0
    %v729 = vadd.f32 0.0, %v728
    %v730 = vpop.f32.mrb[0].mxu0
    %731 = vmatprep.mubr.bf16.mxu0 %v358
    %732 = vmatmul.mubr.bf16.gmra.mrb[0].mxu0 %v357
    %v733 = vpop.f32.mrb[0].mxu0
    %v734 = vadd.f32 0.0, %v733
    %v735 = vpop.f32.mrb[0].mxu0
    %v736 = vpop.f32.mrb[0].mxu0
    %v737 = vadd.f32 0.0, %v736
    %v738 = vpop.f32.mrb[0].mxu0
    %739 = vmatprep.mubr.bf16.mxu0 %v360
    %740 = vmatmul.mubr.bf16.gmra.mrb[0].mxu0 %v359
    %v741 = vpop.f32.mrb[0].mxu0
    %v742 = vadd.f32 0.0, %v741
    %v743 = vpop.f32.mrb[0].mxu0
    %v744 = vpop.f32.mrb[0].mxu0
    %v745 = vadd.f32 0.0, %v744
    %v746 = vpop.f32.mrb[0].mxu0
    %747 = vmatprep.mubr.bf16.mxu0 %v362
    %748 = vmatmul.mubr.bf16.gmra.mrb[0].mxu0 %v361
    %v749 = vpop.f32.mrb[0].mxu0
    %v750 = vadd.f32 0.0, %v749
    %v751 = vpop.f32.mrb[0].mxu0
    %v752 = vpop.f32.mrb[0].mxu0
    %v753 = vadd.f32 0.0, %v752
    %v754 = vpop.f32.mrb[0].mxu0
    %755 = vmatprep.mubr.bf16.mxu0 %v364
    %756 = vmatmul.mubr.bf16.gmra.mrb[0].mxu0 %v363
    %v757 = vpop.f32.mrb[0].mxu0
    %v758 = vadd.f32 0.0, %v757
    %v759 = vpop.f32.mrb[0].mxu0
    %v760 = vpop.f32.mrb[0].mxu0
    %v761 = vadd.f32 0.0, %v760
    %v762 = vpop.f32.mrb[0].mxu0
    %763 = vmatprep.mubr.bf16.mxu0 %v366
    %764 = vmatmul.mubr.bf16.gmra.mrb[0].mxu0 %v365
    %v765 = vpop.f32.mrb[0].mxu0
    %v766 = vadd.f32 0.0, %v765
    %v767 = vpop.f32.mrb[0].mxu0
    %v768 = vpop.f32.mrb[0].mxu0
    %v769 = vadd.f32 0.0, %v768
    %v770 = vpop.f32.mrb[0].mxu0
    %771 = vmatprep.mubr.bf16.mxu0 %v368
    %772 = vmatmul.mubr.bf16.gmra.mrb[0].mxu0 %v367
    %v773 = vpop.f32.mrb[0].mxu0
    %v774 = vadd.f32 0.0, %v773
    %v775 = vpop.f32.mrb[0].mxu0
    %v776 = vpop.f32.mrb[0].mxu0
    %v777 = vadd.f32 0.0, %v776
    %v778 = vpop.f32.mrb[0].mxu0
    %779 = vmatprep.mubr.bf16.mxu0 %v370
    %780 = vmatmul.mubr.bf16.gmra.mrb[0].mxu0 %v369
    %v781 = vpop.f32.mrb[0].mxu0
    %v782 = vadd.f32 0.0, %v781
    %v783 = vpop.f32.mrb[0].mxu0
    %v784 = vpop.f32.mrb[0].mxu0
    %v785 = vadd.f32 0.0, %v784
    %v786 = vpop.f32.mrb[0].mxu0
    %787 = vdwg.mxu0
    %v788 = vadd.f32 %v243, %v534
    %v789 = vadd.f32 %v244, %v537
    %v790 = vadd.f32 %v245, %v542
    %v791 = vadd.f32 %v246, %v545
    %v792 = vadd.f32 %v247, %v550
    %v793 = vadd.f32 %v248, %v553
    %v794 = vadd.f32 %v249, %v558
    %v795 = vadd.f32 %v250, %v561
    %v796 = vadd.f32 %v251, %v566
    %v797 = vadd.f32 %v252, %v569
    %v798 = vadd.f32 %v253, %v574
    %v799 = vadd.f32 %v254, %v577
    %v800 = vadd.f32 %v255, %v582
    %v801 = vadd.f32 %v256, %v585
    %v802 = vadd.f32 %v257, %v590
    %v803 = vadd.f32 %v258, %v593
    %v804 = vadd.f32 %v259, %v598
    %v805 = vadd.f32 %v260, %v601
    %v806 = vadd.f32 %v261, %v606
    %v807 = vadd.f32 %v262, %v609
    %v808 = vadd.f32 %v263, %v614
    %v809 = vadd.f32 %v264, %v617
    %v810 = vadd.f32 %v265, %v622
    %v811 = vadd.f32 %v266, %v625
    %v812 = vadd.f32 %v267, %v630
    %v813 = vadd.f32 %v268, %v633
    %v814 = vadd.f32 %v269, %v638
    %v815 = vadd.f32 %v270, %v641
    %v816 = vadd.f32 %v271, %v646
    %v817 = vadd.f32 %v272, %v649
    %v818 = vadd.f32 %v273, %v654
    %v819 = vadd.f32 %v274, %v657
    %v820 = vadd.f32 %v275, %v662
    %v821 = vadd.f32 %v276, %v665
    %v822 = vadd.f32 %v277, %v670
    %v823 = vadd.f32 %v278, %v673
    %v824 = vadd.f32 %v279, %v678
    %v825 = vadd.f32 %v280, %v681
    %v826 = vadd.f32 %v281, %v686
    %v827 = vadd.f32 %v282, %v689
    %v828 = vadd.f32 %v283, %v694
    %v829 = vadd.f32 %v284, %v697
    %v830 = vadd.f32 %v285, %v702
    %v831 = vadd.f32 %v286, %v705
    %v832 = vadd.f32 %v287, %v710
    %v833 = vadd.f32 %v288, %v713
    %v834 = vadd.f32 %v289, %v718
    %v835 = vadd.f32 %v290, %v721
    %v836 = vadd.f32 %v291, %v726
    %v837 = vadd.f32 %v292, %v729
    %v838 = vadd.f32 %v293, %v734
    %v839 = vadd.f32 %v294, %v737
    %v840 = vadd.f32 %v295, %v742
    %v841 = vadd.f32 %v296, %v745
    %v842 = vadd.f32 %v297, %v750
    %v843 = vadd.f32 %v298, %v753
    %v844 = vadd.f32 %v299, %v758
    %v845 = vadd.f32 %v300, %v761
    %v846 = vadd.f32 %v301, %v766
    %v847 = vadd.f32 %v302, %v769
    %v848 = vadd.f32 %v303, %v774
    %v849 = vadd.f32 %v304, %v777
    %v850 = vadd.f32 %v305, %v782
    %v851 = vadd.f32 %v306, %v785
    %852 = vst [vmem:[#allocation2] sm:$0xff] %v788
    %853 = vst [vmem:[#allocation2 + $0x8] sm:$0xff] %v789
    %854 = vst [vmem:[#allocation2 + $0x10] sm:$0xff] %v790
    %855 = vst [vmem:[#allocation2 + $0x18] sm:$0xff] %v791
    %856 = vst [vmem:[#allocation2 + $0x20] sm:$0xff] %v792
    %857 = vst [vmem:[#allocation2 + $0x28] sm:$0xff] %v793
    %858 = vst [vmem:[#allocation2 + $0x30] sm:$0xff] %v794
    %859 = vst [vmem:[#allocation2 + $0x38] sm:$0xff] %v795
    %860 = vst [vmem:[#allocation2 + $0x40] sm:$0xff] %v796
    %861 = vst [vmem:[#allocation2 + $0x48] sm:$0xff] %v797
    %862 = vst [vmem:[#allocation2 + $0x50] sm:$0xff] %v798
    %863 = vst [vmem:[#allocation2 + $0x58] sm:$0xff] %v799
    %864 = vst [vmem:[#allocation2 + $0x60] sm:$0xff] %v800
    %865 = vst [vmem:[#allocation2 + $0x68] sm:$0xff] %v801
    %866 = vst [vmem:[#allocation2 + $0x70] sm:$0xff] %v802
    %867 = vst [vmem:[#allocation2 + $0x78] sm:$0xff] %v803
    %868 = vst [vmem:[#allocation2 + $0x80] sm:$0xff] %v804
    %869 = vst [vmem:[#allocation2 + $0x88] sm:$0xff] %v805
    %870 = vst [vmem:[#allocation2 + $0x90] sm:$0xff] %v806
    %871 = vst [vmem:[#allocation2 + $0x98] sm:$0xff] %v807
    %872 = vst [vmem:[#allocation2 + $0xa0] sm:$0xff] %v808
    %873 = vst [vmem:[#allocation2 + $0xa8] sm:$0xff] %v809
    %874 = vst [vmem:[#allocation2 + $0xb0] sm:$0xff] %v810
    %875 = vst [vmem:[#allocation2 + $0xb8] sm:$0xff] %v811
    %876 = vst [vmem:[#allocation2 + $0xc0] sm:$0xff] %v812
    %877 = vst [vmem:[#allocation2 + $0xc8] sm:$0xff] %v813
    %878 = vst [vmem:[#allocation2 + $0xd0] sm:$0xff] %v814
    %879 = vst [vmem:[#allocation2 + $0xd8] sm:$0xff] %v815
    %880 = vst [vmem:[#allocation2 + $0xe0] sm:$0xff] %v816
    %881 = vst [vmem:[#allocation2 + $0xe8] sm:$0xff] %v817
    %882 = vst [vmem:[#allocation2 + $0xf0] sm:$0xff] %v818
    %883 = vst [vmem:[#allocation2 + $0xf8] sm:$0xff] %v819
    %884 = vst [vmem:[#allocation2 + $0x100] sm:$0xff] %v820
    %885 = vst [vmem:[#allocation2 + $0x108] sm:$0xff] %v821
    %886 = vst [vmem:[#allocation2 + $0x110] sm:$0xff] %v822
    %887 = vst [vmem:[#allocation2 + $0x118] sm:$0xff] %v823
    %888 = vst [vmem:[#allocation2 + $0x120] sm:$0xff] %v824
    %889 = vst [vmem:[#allocation2 + $0x128] sm:$0xff] %v825
    %890 = vst [vmem:[#allocation2 + $0x130] sm:$0xff] %v826
    %891 = vst [vmem:[#allocation2 + $0x138] sm:$0xff] %v827
    %892 = vst [vmem:[#allocation2 + $0x140] sm:$0xff] %v828
    %893 = vst [vmem:[#allocation2 + $0x148] sm:$0xff] %v829
    %894 = vst [vmem:[#allocation2 + $0x150] sm:$0xff] %v830
    %895 = vst [vmem:[#allocation2 + $0x158] sm:$0xff] %v831
    %896 = vst [vmem:[#allocation2 + $0x160] sm:$0xff] %v832
    %897 = vst [vmem:[#allocation2 + $0x168] sm:$0xff] %v833
    %898 = vst [vmem:[#allocation2 + $0x170] sm:$0xff] %v834
    %899 = vst [vmem:[#allocation2 + $0x178] sm:$0xff] %v835
    %900 = vst [vmem:[#allocation2 + $0x180] sm:$0xff] %v836
    %901 = vst [vmem:[#allocation2 + $0x188] sm:$0xff] %v837
    %902 = vst [vmem:[#allocation2 + $0x190] sm:$0xff] %v838
    %903 = vst [vmem:[#allocation2 + $0x198] sm:$0xff] %v839
    %904 = vst [vmem:[#allocation2 + $0x1a0] sm:$0xff] %v840
    %905 = vst [vmem:[#allocation2 + $0x1a8] sm:$0xff] %v841
    %906 = vst [vmem:[#allocation2 + $0x1b0] sm:$0xff] %v842
    %907 = vst [vmem:[#allocation2 + $0x1b8] sm:$0xff] %v843
    %908 = vst [vmem:[#allocation2 + $0x1c0] sm:$0xff] %v844
    %909 = vst [vmem:[#allocation2 + $0x1c8] sm:$0xff] %v845
    %910 = vst [vmem:[#allocation2 + $0x1d0] sm:$0xff] %v846
    %911 = vst [vmem:[#allocation2 + $0x1d8] sm:$0xff] %v847
    %912 = vst [vmem:[#allocation2 + $0x1e0] sm:$0xff] %v848
    %913 = vst [vmem:[#allocation2 + $0x1e8] sm:$0xff] %v849
    %914 = vst [vmem:[#allocation2 + $0x1f0] sm:$0xff] %v850
    %915 = vst [vmem:[#allocation2 + $0x1f8] sm:$0xff] %v851
    // Predicated region
    $region30: #{tpu_custom_call.1} parent=1 // pred_check
      %p916 = pneg %p47
    $region31: #{tpu_custom_call.1} parent=1 // pred_check_branch
      %918 = sbr.rel (%p916) target = $region33
    $region32: #{tpu_custom_call.1} parent=1 // pred_region
      %v919 = vld [vmem:[#allocation2] sm:$0xff]
      %v920 = vld [vmem:[#allocation2 + $0x8] sm:$0xff]
      %v921 = vld [vmem:[#allocation2 + $0x10] sm:$0xff]
      %v922 = vld [vmem:[#allocation2 + $0x18] sm:$0xff]
      %v923 = vld [vmem:[#allocation2 + $0x20] sm:$0xff]
      %v924 = vld [vmem:[#allocation2 + $0x28] sm:$0xff]
      %v925 = vld [vmem:[#allocation2 + $0x30] sm:$0xff]
      %v926 = vld [vmem:[#allocation2 + $0x38] sm:$0xff]
      %v927 = vld [vmem:[#allocation2 + $0x40] sm:$0xff]
      %v928 = vld [vmem:[#allocation2 + $0x48] sm:$0xff]
      %v929 = vld [vmem:[#allocation2 + $0x50] sm:$0xff]
      %v930 = vld [vmem:[#allocation2 + $0x58] sm:$0xff]
      %v931 = vld [vmem:[#allocation2 + $0x60] sm:$0xff]
      %v932 = vld [vmem:[#allocation2 + $0x68] sm:$0xff]
      %v933 = vld [vmem:[#allocation2 + $0x70] sm:$0xff]
      %v934 = vld [vmem:[#allocation2 + $0x78] sm:$0xff]
      %v935 = vld [vmem:[#allocation2 + $0x80] sm:$0xff]
      %v936 = vld [vmem:[#allocation2 + $0x88] sm:$0xff]
      %v937 = vld [vmem:[#allocation2 + $0x90] sm:$0xff]
      %v938 = vld [vmem:[#allocation2 + $0x98] sm:$0xff]
      %v939 = vld [vmem:[#allocation2 + $0xa0] sm:$0xff]
      %v940 = vld [vmem:[#allocation2 + $0xa8] sm:$0xff]
      %v941 = vld [vmem:[#allocation2 + $0xb0] sm:$0xff]
      %v942 = vld [vmem:[#allocation2 + $0xb8] sm:$0xff]
      %v943 = vld [vmem:[#allocation2 + $0xc0] sm:$0xff]
      %v944 = vld [vmem:[#allocation2 + $0xc8] sm:$0xff]
      %v945 = vld [vmem:[#allocation2 + $0xd0] sm:$0xff]
      %v946 = vld [vmem:[#allocation2 + $0xd8] sm:$0xff]
      %v947 = vld [vmem:[#allocation2 + $0xe0] sm:$0xff]
      %v948 = vld [vmem:[#allocation2 + $0xe8] sm:$0xff]
      %v949 = vld [vmem:[#allocation2 + $0xf0] sm:$0xff]
      %v950 = vld [vmem:[#allocation2 + $0xf8] sm:$0xff]
      %v951 = vld [vmem:[#allocation2 + $0x100] sm:$0xff]
      %v952 = vld [vmem:[#allocation2 + $0x108] sm:$0xff]
      %v953 = vld [vmem:[#allocation2 + $0x110] sm:$0xff]
      %v954 = vld [vmem:[#allocation2 + $0x118] sm:$0xff]
      %v955 = vld [vmem:[#allocation2 + $0x120] sm:$0xff]
      %v956 = vld [vmem:[#allocation2 + $0x128] sm:$0xff]
      %v957 = vld [vmem:[#allocation2 + $0x130] sm:$0xff]
      %v958 = vld [vmem:[#allocation2 + $0x138] sm:$0xff]
      %v959 = vld [vmem:[#allocation2 + $0x140] sm:$0xff]
      %v960 = vld [vmem:[#allocation2 + $0x148] sm:$0xff]
      %v961 = vld [vmem:[#allocation2 + $0x150] sm:$0xff]
      %v962 = vld [vmem:[#allocation2 + $0x158] sm:$0xff]
      %v963 = vld [vmem:[#allocation2 + $0x160] sm:$0xff]
      %v964 = vld [vmem:[#allocation2 + $0x168] sm:$0xff]
      %v965 = vld [vmem:[#allocation2 + $0x170] sm:$0xff]
      %v966 = vld [vmem:[#allocation2 + $0x178] sm:$0xff]
      %v967 = vld [vmem:[#allocation2 + $0x180] sm:$0xff]
      %v968 = vld [vmem:[#allocation2 + $0x188] sm:$0xff]
      %v969 = vld [vmem:[#allocation2 + $0x190] sm:$0xff]
      %v970 = vld [vmem:[#allocation2 + $0x198] sm:$0xff]
      %v971 = vld [vmem:[#allocation2 + $0x1a0] sm:$0xff]
      %v972 = vld [vmem:[#allocation2 + $0x1a8] sm:$0xff]
      %v973 = vld [vmem:[#allocation2 + $0x1b0] sm:$0xff]
      %v974 = vld [vmem:[#allocation2 + $0x1b8] sm:$0xff]
      %v975 = vld [vmem:[#allocation2 + $0x1c0] sm:$0xff]
      %v976 = vld [vmem:[#allocation2 + $0x1c8] sm:$0xff]
      %v977 = vld [vmem:[#allocation2 + $0x1d0] sm:$0xff]
      %v978 = vld [vmem:[#allocation2 + $0x1d8] sm:$0xff]
      %v979 = vld [vmem:[#allocation2 + $0x1e0] sm:$0xff]
      %v980 = vld [vmem:[#allocation2 + $0x1e8] sm:$0xff]
      %v981 = vld [vmem:[#allocation2 + $0x1f0] sm:$0xff]
      %v982 = vld [vmem:[#allocation2 + $0x1f8] sm:$0xff]
      %v983 = vld [vmem:[%s2] sm:$0x1]
      %v985 = vlaneseq
      %v986 = vshrl.u32 %v985, 7
      %v987 = vsub.s32 0, %v986
      %v988 = vrot.slane %v983, %v987
      %v990 = vmul.f32 %v919, %v988
      %v991 = vmul.f32 %v920, %v988
      %v992 = vmul.f32 %v921, %v988
      %v993 = vmul.f32 %v922, %v988
      %v994 = vmul.f32 %v923, %v988
      %v995 = vmul.f32 %v924, %v988
      %v996 = vmul.f32 %v925, %v988
      %v997 = vmul.f32 %v926, %v988
      %v998 = vmul.f32 %v927, %v988
      %v999 = vmul.f32 %v928, %v988
      %v1000 = vmul.f32 %v929, %v988
      %v1001 = vmul.f32 %v930, %v988
      %v1002 = vmul.f32 %v931, %v988
      %v1003 = vmul.f32 %v932, %v988
      %v1004 = vmul.f32 %v933, %v988
      %v1005 = vmul.f32 %v934, %v988
      %v1006 = vmul.f32 %v935, %v988
      %v1007 = vmul.f32 %v936, %v988
      %v1008 = vmul.f32 %v937, %v988
      %v1009 = vmul.f32 %v938, %v988
      %v1010 = vmul.f32 %v939, %v988
      %v1011 = vmul.f32 %v940, %v988
      %v1012 = vmul.f32 %v941, %v988
      %v1013 = vmul.f32 %v942, %v988
      %v1014 = vmul.f32 %v943, %v988
      %v1015 = vmul.f32 %v944, %v988
      %v1016 = vmul.f32 %v945, %v988
      %v1017 = vmul.f32 %v946, %v988
      %v1018 = vmul.f32 %v947, %v988
      %v1019 = vmul.f32 %v948, %v988
      %v1020 = vmul.f32 %v949, %v988
      %v1021 = vmul.f32 %v950, %v988
      %v1022 = vmul.f32 %v951, %v988
      %v1023 = vmul.f32 %v952, %v988
      %v1024 = vmul.f32 %v953, %v988
      %v1025 = vmul.f32 %v954, %v988
      %v1026 = vmul.f32 %v955, %v988
      %v1027 = vmul.f32 %v956, %v988
      %v1028 = vmul.f32 %v957, %v988
      %v1029 = vmul.f32 %v958, %v988
      %v1030 = vmul.f32 %v959, %v988
      %v1031 = vmul.f32 %v960, %v988
      %v1032 = vmul.f32 %v961, %v988
      %v1033 = vmul.f32 %v962, %v988
      %v1034 = vmul.f32 %v963, %v988
      %v1035 = vmul.f32 %v964, %v988
      %v1036 = vmul.f32 %v965, %v988
      %v1037 = vmul.f32 %v966, %v988
      %v1038 = vmul.f32 %v967, %v988
      %v1039 = vmul.f32 %v968, %v988
      %v1040 = vmul.f32 %v969, %v988
      %v1041 = vmul.f32 %v970, %v988
      %v1042 = vmul.f32 %v971, %v988
      %v1043 = vmul.f32 %v972, %v988
      %v1044 = vmul.f32 %v973, %v988
      %v1045 = vmul.f32 %v974, %v988
      %v1046 = vmul.f32 %v975, %v988
      %v1047 = vmul.f32 %v976, %v988
      %v1048 = vmul.f32 %v977, %v988
      %v1049 = vmul.f32 %v978, %v988
      %v1050 = vmul.f32 %v979, %v988
      %v1051 = vmul.f32 %v980, %v988
      %v1052 = vmul.f32 %v981, %v988
      %v1053 = vmul.f32 %v982, %v988
      %v1054 = vld [vmem:[%s3] sm:$0x1]
      %v1056 = vlaneseq
      %v1057 = vshrl.u32 %v1056, 7
      %v1058 = vsub.s32 0, %v1057
      %v1059 = vrot.slane %v1054, %v1058
      %v1061 = vadd.f32 %v990, %v1059
      %v1062 = vadd.f32 %v991, %v1059
      %v1063 = vadd.f32 %v992, %v1059
      %v1064 = vadd.f32 %v993, %v1059
      %v1065 = vadd.f32 %v994, %v1059
      %v1066 = vadd.f32 %v995, %v1059
      %v1067 = vadd.f32 %v996, %v1059
      %v1068 = vadd.f32 %v997, %v1059
      %v1069 = vadd.f32 %v998, %v1059
      %v1070 = vadd.f32 %v999, %v1059
      %v1071 = vadd.f32 %v1000, %v1059
      %v1072 = vadd.f32 %v1001, %v1059
      %v1073 = vadd.f32 %v1002, %v1059
      %v1074 = vadd.f32 %v1003, %v1059
      %v1075 = vadd.f32 %v1004, %v1059
      %v1076 = vadd.f32 %v1005, %v1059
      %v1077 = vadd.f32 %v1006, %v1059
      %v1078 = vadd.f32 %v1007, %v1059
      %v1079 = vadd.f32 %v1008, %v1059
      %v1080 = vadd.f32 %v1009, %v1059
      %v1081 = vadd.f32 %v1010, %v1059
      %v1082 = vadd.f32 %v1011, %v1059
      %v1083 = vadd.f32 %v1012, %v1059
      %v1084 = vadd.f32 %v1013, %v1059
      %v1085 = vadd.f32 %v1014, %v1059
      %v1086 = vadd.f32 %v1015, %v1059
      %v1087 = vadd.f32 %v1016, %v1059
      %v1088 = vadd.f32 %v1017, %v1059
      %v1089 = vadd.f32 %v1018, %v1059
      %v1090 = vadd.f32 %v1019, %v1059
      %v1091 = vadd.f32 %v1020, %v1059
      %v1092 = vadd.f32 %v1021, %v1059
      %v1093 = vadd.f32 %v1022, %v1059
      %v1094 = vadd.f32 %v1023, %v1059
      %v1095 = vadd.f32 %v1024, %v1059
      %v1096 = vadd.f32 %v1025, %v1059
      %v1097 = vadd.f32 %v1026, %v1059
      %v1098 = vadd.f32 %v1027, %v1059
      %v1099 = vadd.f32 %v1028, %v1059
      %v1100 = vadd.f32 %v1029, %v1059
      %v1101 = vadd.f32 %v1030, %v1059
      %v1102 = vadd.f32 %v1031, %v1059
      %v1103 = vadd.f32 %v1032, %v1059
      %v1104 = vadd.f32 %v1033, %v1059
      %v1105 = vadd.f32 %v1034, %v1059
      %v1106 = vadd.f32 %v1035, %v1059
      %v1107 = vadd.f32 %v1036, %v1059
      %v1108 = vadd.f32 %v1037, %v1059
      %v1109 = vadd.f32 %v1038, %v1059
      %v1110 = vadd.f32 %v1039, %v1059
      %v1111 = vadd.f32 %v1040, %v1059
      %v1112 = vadd.f32 %v1041, %v1059
      %v1113 = vadd.f32 %v1042, %v1059
      %v1114 = vadd.f32 %v1043, %v1059
      %v1115 = vadd.f32 %v1044, %v1059
      %v1116 = vadd.f32 %v1045, %v1059
      %v1117 = vadd.f32 %v1046, %v1059
      %v1118 = vadd.f32 %v1047, %v1059
      %v1119 = vadd.f32 %v1048, %v1059
      %v1120 = vadd.f32 %v1049, %v1059
      %v1121 = vadd.f32 %v1050, %v1059
      %v1122 = vadd.f32 %v1051, %v1059
      %v1123 = vadd.f32 %v1052, %v1059
      %v1124 = vadd.f32 %v1053, %v1059
      %v1125 = vmax.f32 %v1061, 0.0
      %v1126 = vmax.f32 %v1062, 0.0
      %v1127 = vmax.f32 %v1063, 0.0
      %v1128 = vmax.f32 %v1064, 0.0
      %v1129 = vmax.f32 %v1065, 0.0
      %v1130 = vmax.f32 %v1066, 0.0
      %v1131 = vmax.f32 %v1067, 0.0
      %v1132 = vmax.f32 %v1068, 0.0
      %v1133 = vmax.f32 %v1069, 0.0
      %v1134 = vmax.f32 %v1070, 0.0
      %v1135 = vmax.f32 %v1071, 0.0
      %v1136 = vmax.f32 %v1072, 0.0
      %v1137 = vmax.f32 %v1073, 0.0
      %v1138 = vmax.f32 %v1074, 0.0
      %v1139 = vmax.f32 %v1075, 0.0
      %v1140 = vmax.f32 %v1076, 0.0
      %v1141 = vmax.f32 %v1077, 0.0
      %v1142 = vmax.f32 %v1078, 0.0
      %v1143 = vmax.f32 %v1079, 0.0
      %v1144 = vmax.f32 %v1080, 0.0
      %v1145 = vmax.f32 %v1081, 0.0
      %v1146 = vmax.f32 %v1082, 0.0
      %v1147 = vmax.f32 %v1083, 0.0
      %v1148 = vmax.f32 %v1084, 0.0
      %v1149 = vmax.f32 %v1085, 0.0
      %v1150 = vmax.f32 %v1086, 0.0
      %v1151 = vmax.f32 %v1087, 0.0
      %v1152 = vmax.f32 %v1088, 0.0
      %v1153 = vmax.f32 %v1089, 0.0
      %v1154 = vmax.f32 %v1090, 0.0
      %v1155 = vmax.f32 %v1091, 0.0
      %v1156 = vmax.f32 %v1092, 0.0
      %v1157 = vmax.f32 %v1093, 0.0
      %v1158 = vmax.f32 %v1094, 0.0
      %v1159 = vmax.f32 %v1095, 0.0
      %v1160 = vmax.f32 %v1096, 0.0
      %v1161 = vmax.f32 %v1097, 0.0
      %v1162 = vmax.f32 %v1098, 0.0
      %v1163 = vmax.f32 %v1099, 0.0
      %v1164 = vmax.f32 %v1100, 0.0
      %v1165 = vmax.f32 %v1101, 0.0
      %v1166 = vmax.f32 %v1102, 0.0
      %v1167 = vmax.f32 %v1103, 0.0
      %v1168 = vmax.f32 %v1104, 0.0
      %v1169 = vmax.f32 %v1105, 0.0
      %v1170 = vmax.f32 %v1106, 0.0
      %v1171 = vmax.f32 %v1107, 0.0
      %v1172 = vmax.f32 %v1108, 0.0
      %v1173 = vmax.f32 %v1109, 0.0
      %v1174 = vmax.f32 %v1110, 0.0
      %v1175 = vmax.f32 %v1111, 0.0
      %v1176 = vmax.f32 %v1112, 0.0
      %v1177 = vmax.f32 %v1113, 0.0
      %v1178 = vmax.f32 %v1114, 0.0
      %v1179 = vmax.f32 %v1115, 0.0
      %v1180 = vmax.f32 %v1116, 0.0
      %v1181 = vmax.f32 %v1117, 0.0
      %v1182 = vmax.f32 %v1118, 0.0
      %v1183 = vmax.f32 %v1119, 0.0
      %v1184 = vmax.f32 %v1120, 0.0
      %v1185 = vmax.f32 %v1121, 0.0
      %v1186 = vmax.f32 %v1122, 0.0
      %v1187 = vmax.f32 %v1123, 0.0
      %v1188 = vmax.f32 %v1124, 0.0
      %1189 = vst [vmem:[#allocation8] sm:$0xff] %v1125
      %1190 = vst [vmem:[#allocation8 + $0x8] sm:$0xff] %v1126
      %1191 = vst [vmem:[#allocation8 + $0x10] sm:$0xff] %v1127
      %1192 = vst [vmem:[#allocation8 + $0x18] sm:$0xff] %v1128
      %1193 = vst [vmem:[#allocation8 + $0x20] sm:$0xff] %v1129
      %1194 = vst [vmem:[#allocation8 + $0x28] sm:$0xff] %v1130
      %1195 = vst [vmem:[#allocation8 + $0x30] sm:$0xff] %v1131
      %1196 = vst [vmem:[#allocation8 + $0x38] sm:$0xff] %v1132
      %1197 = vst [vmem:[#allocation8 + $0x40] sm:$0xff] %v1133
      %1198 = vst [vmem:[#allocation8 + $0x48] sm:$0xff] %v1134
      %1199 = vst [vmem:[#allocation8 + $0x50] sm:$0xff] %v1135
      %1200 = vst [vmem:[#allocation8 + $0x58] sm:$0xff] %v1136
      %1201 = vst [vmem:[#allocation8 + $0x60] sm:$0xff] %v1137
      %1202 = vst [vmem:[#allocation8 + $0x68] sm:$0xff] %v1138
      %1203 = vst [vmem:[#allocation8 + $0x70] sm:$0xff] %v1139
      %1204 = vst [vmem:[#allocation8 + $0x78] sm:$0xff] %v1140
      %1205 = vst [vmem:[#allocation8 + $0x80] sm:$0xff] %v1141
      %1206 = vst [vmem:[#allocation8 + $0x88] sm:$0xff] %v1142
      %1207 = vst [vmem:[#allocation8 + $0x90] sm:$0xff] %v1143
      %1208 = vst [vmem:[#allocation8 + $0x98] sm:$0xff] %v1144
      %1209 = vst [vmem:[#allocation8 + $0xa0] sm:$0xff] %v1145
      %1210 = vst [vmem:[#allocation8 + $0xa8] sm:$0xff] %v1146
      %1211 = vst [vmem:[#allocation8 + $0xb0] sm:$0xff] %v1147
      %1212 = vst [vmem:[#allocation8 + $0xb8] sm:$0xff] %v1148
      %1213 = vst [vmem:[#allocation8 + $0xc0] sm:$0xff] %v1149
      %1214 = vst [vmem:[#allocation8 + $0xc8] sm:$0xff] %v1150
      %1215 = vst [vmem:[#allocation8 + $0xd0] sm:$0xff] %v1151
      %1216 = vst [vmem:[#allocation8 + $0xd8] sm:$0xff] %v1152
      %1217 = vst [vmem:[#allocation8 + $0xe0] sm:$0xff] %v1153
      %1218 = vst [vmem:[#allocation8 + $0xe8] sm:$0xff] %v1154
      %1219 = vst [vmem:[#allocation8 + $0xf0] sm:$0xff] %v1155
      %1220 = vst [vmem:[#allocation8 + $0xf8] sm:$0xff] %v1156
      %1221 = vst [vmem:[#allocation8 + $0x100] sm:$0xff] %v1157
      %1222 = vst [vmem:[#allocation8 + $0x108] sm:$0xff] %v1158
      %1223 = vst [vmem:[#allocation8 + $0x110] sm:$0xff] %v1159
      %1224 = vst [vmem:[#allocation8 + $0x118] sm:$0xff] %v1160
      %1225 = vst [vmem:[#allocation8 + $0x120] sm:$0xff] %v1161
      %1226 = vst [vmem:[#allocation8 + $0x128] sm:$0xff] %v1162
      %1227 = vst [vmem:[#allocation8 + $0x130] sm:$0xff] %v1163
      %1228 = vst [vmem:[#allocation8 + $0x138] sm:$0xff] %v1164
      %1229 = vst [vmem:[#allocation8 + $0x140] sm:$0xff] %v1165
      %1230 = vst [vmem:[#allocation8 + $0x148] sm:$0xff] %v1166
      %1231 = vst [vmem:[#allocation8 + $0x150] sm:$0xff] %v1167
      %1232 = vst [vmem:[#allocation8 + $0x158] sm:$0xff] %v1168
      %1233 = vst [vmem:[#allocation8 + $0x160] sm:$0xff] %v1169
      %1234 = vst [vmem:[#allocation8 + $0x168] sm:$0xff] %v1170
      %1235 = vst [vmem:[#allocation8 + $0x170] sm:$0xff] %v1171
      %1236 = vst [vmem:[#allocation8 + $0x178] sm:$0xff] %v1172
      %1237 = vst [vmem:[#allocation8 + $0x180] sm:$0xff] %v1173
      %1238 = vst [vmem:[#allocation8 + $0x188] sm:$0xff] %v1174
      %1239 = vst [vmem:[#allocation8 + $0x190] sm:$0xff] %v1175
      %1240 = vst [vmem:[#allocation8 + $0x198] sm:$0xff] %v1176
      %1241 = vst [vmem:[#allocation8 + $0x1a0] sm:$0xff] %v1177
      %1242 = vst [vmem:[#allocation8 + $0x1a8] sm:$0xff] %v1178
      %1243 = vst [vmem:[#allocation8 + $0x1b0] sm:$0xff] %v1179
      %1244 = vst [vmem:[#allocation8 + $0x1b8] sm:$0xff] %v1180
      %1245 = vst [vmem:[#allocation8 + $0x1c0] sm:$0xff] %v1181
      %1246 = vst [vmem:[#allocation8 + $0x1c8] sm:$0xff] %v1182
      %1247 = vst [vmem:[#allocation8 + $0x1d0] sm:$0xff] %v1183
      %1248 = vst [vmem:[#allocation8 + $0x1d8] sm:$0xff] %v1184
      %1249 = vst [vmem:[#allocation8 + $0x1e0] sm:$0xff] %v1185
      %1250 = vst [vmem:[#allocation8 + $0x1e8] sm:$0xff] %v1186
      %1251 = vst [vmem:[#allocation8 + $0x1f0] sm:$0xff] %v1187
      %1252 = vst [vmem:[#allocation8 + $0x1f8] sm:$0xff] %v1188
    $region33: #{tpu_custom_call.1} parent=1 // pred_fallthru
      _
    // Predicated region
    $region34: #{tpu_custom_call.1} parent=1 // pred_check
      _
    $region35: #{tpu_custom_call.1} parent=1 // pred_check_branch
      %1254 = sbr.rel (0) target = $region37
    $region36: #{tpu_custom_call.1} parent=1 // pred_region
      %s1256 = ssub.s32 8192, 8192
      %1257 = vsyncadd [#allocation5], %s1256
      %s1258 = sshll.u32 [#allocation8], 4
      %s1259 = int_to_ptr.vmem [resolvable:$true] %s1258
      %1264 = dma.vmem_to_hbm [thread:$0]  %s1259, 8192, %s4, [#allocation5], 128, 128, 8
    $region37: #{tpu_custom_call.1} parent=1 // pred_fallthru
      _
    // Predicated region
    $region38: #{tpu_custom_call.1} parent=1 // pred_check
      _
    $region39: #{tpu_custom_call.1} parent=1 // pred_check_branch
      %1266 = sbr.rel (0) target = $region41
    $region40: #{tpu_custom_call.1} parent=1 // pred_region
      %1267 = dma.done [#allocation5], 8192
    $region41: #{tpu_custom_call.1} parent=1 // pred_fallthru
      _
    %1268 = vsyncpa [#allocation4], 1
    %1269 = vsyncpa [#allocation7], 1
    %1270 = vsyncpa [#allocation5], 1

</llo_original>
